<compile_context>
chip_gen: v5e
topology: v5e:2x2
jax: 0.10.0
libtpu: 0.0.40
codegen_flags: <defaults>
</compile_context>

<pallas_src>
import jax
import jax.numpy as jnp
from jax import lax
from jax.experimental import pallas as pl

INPUT_SIZE = 1
HIDDEN = 32
NUM_LAYERS = 2
OUTPUT_SIZE = 1
LANES = 128


def _round_up(n, m):
    return ((n + m - 1) // m) * m


def lstm_model_kernel(a_ref,                          # (seq*Bp, H) f32, time-major rows t*Bp + b
                      wih0_ref, whh0_ref, bl0_ref,    # (H,4H) bf16, (H,4H) bf16, (1,4H) f32
                      wih1_ref, whh1_ref, bl1_ref,    # (H,4H) bf16, (H,4H) bf16, (1,4H) f32
                      w2l0_ref, w2l1_ref, b2_ref,     # (H,128) bf16, (H,128) bf16, (1,128) f32
                      out_ref):                       # (Bp, 128) f32, lane-dense
    Bp = out_ref.shape[0]
    H = whh0_ref.shape[0]
    H4 = 4 * H
    seq = a_ref.shape[0] // Bp

    # ---- One-shot layer-0 i2h precompute for the whole sequence, kept in
    # registers (seq*Bp*4H f32 = seq vregs at Bp=8; tiny).  For long sequences
    # this should fall back to a chunked VMEM-scratch pipeline (v7x VMEM is
    # only 64 MiB) — not needed at this size.
    a_bf = a_ref[...].astype(jnp.bfloat16)
    u0 = jnp.dot(a_bf, wih0_ref[...],
                 preferred_element_type=jnp.float32) + bl0_ref[...]     # (seq*Bp, 4H) f32

    # ---- Loop invariants, hoisted (JAX does not CSE broadcast_in_dim) ----
    whh0 = whh0_ref[...]
    wih1 = wih1_ref[...]
    whh1 = whh1_ref[...]
    bl1_b = jnp.broadcast_to(bl1_ref[...], (Bp, H4))
    lane = lax.broadcasted_iota(jnp.int32, (Bp, H4), 1)
    g_lane = (lane >= 2 * H) & (lane < 3 * H)          # 'g' gate lanes (tanh); others sigmoid
    pre_scale = jnp.where(g_lane, 1.0, 0.5)            # x for tanh lanes, x/2 for sigmoid lanes
    post_add = jnp.where(g_lane, 0.0, 0.5)

    def gate_act(z):
        # Single full-vreg tanh for all four gates (PyTorch order i, f, g, o):
        # sigmoid(x) = 0.5 * tanh(x / 2) + 0.5, so the non-g lanes reuse the
        # same EUP push with a VALU pre/post scale.
        t = jnp.tanh(z * pre_scale)
        return t * pre_scale + post_add

    zeros = jnp.zeros((Bp, H), jnp.float32)
    h0, c0, h1, c1 = zeros, zeros, zeros, zeros

    # ---- Recurrence: fully unrolled (seq is small and fixed) with static
    # row slices into the in-register u0 — no scratch stores/loads per step.
    # TODO(synk): for long seq use lax.fori_loop(..., unroll=8) over a chunked
    # VMEM scratch to bound instruction memory / vreg live ranges.
    for t in range(seq):
        u0_t = u0[t * Bp:(t + 1) * Bp, :]                                # static slice

        # Layer-1 recurrent term depends only on h1_{t-1}: its MXU push can
        # overlap layer-0's EUP/VALU tail for this step.
        r1 = jnp.dot(h1.astype(jnp.bfloat16), whh1,
                     preferred_element_type=jnp.float32)

        # Layer 0: only the recurrent matmul remains per step.
        g0 = gate_act(u0_t + jnp.dot(h0.astype(jnp.bfloat16), whh0,
                                     preferred_element_type=jnp.float32))
        c0 = g0[:, H:2 * H] * c0 + g0[:, 0:H] * g0[:, 2 * H:3 * H]
        h0 = g0[:, 3 * H:4 * H] * jnp.tanh(c0)

        # Layer 1 (un-fused input/recurrent dots).
        g1 = gate_act(jnp.dot(h0.astype(jnp.bfloat16), wih1,
                              preferred_element_type=jnp.float32) + r1 + bl1_b)
        c1 = g1[:, H:2 * H] * c1 + g1[:, 0:H] * g1[:, 2 * H:3 * H]
        h1 = g1[:, 3 * H:4 * H] * jnp.tanh(c1)

    # ---- Final projection, lane-dense output store (w2/b2 lane-padded to 128
    # in the wrapper; wrapper slices lane 0).  Splitting w2 per layer avoids
    # the h0/h1 lane concat.
    # TODO(synk): nn.Dropout is identity in inference; not modeled in-kernel.
    out_ref[...] = (jnp.dot(h0.astype(jnp.bfloat16), w2l0_ref[...],
                            preferred_element_type=jnp.float32)
                    + jnp.dot(h1.astype(jnp.bfloat16), w2l1_ref[...],
                              preferred_element_type=jnp.float32)
                    + b2_ref[...])


def lstm_model_forward(x, params):
    """x: (batch, seq, input_size) float32 -> (batch,) == predictions[:, -1]."""
    batch, seq, _ = x.shape
    (w1, b1, wih0, whh0, bl0, wih1, whh1, bl1, w2, b2) = params
    H = HIDDEN
    bf = jnp.bfloat16

    # Pad batch to a full sublane tile; padded rows are discarded afterwards
    # (all ops are row-wise independent).
    Bp = max(8, _round_up(batch, 8))
    x_p = jnp.pad(x, ((0, Bp - batch), (0, 0), (0, 0)))

    # linear_1 + ReLU hoisted here (trivial fused elementwise) to avoid a
    # last-dim-1 kernel input that would be 128x lane-padded in VMEM.
    a = jnp.maximum(x_p @ w1 + b1, 0.0)                                  # (Bp, seq, H)
    a_flat = jnp.transpose(a, (1, 0, 2)).reshape(seq * Bp, H)            # row = t*Bp + b

    # Lane-pad the output projection (split per layer -> no in-kernel concat).
    w2_l0 = jnp.pad(w2[:H], ((0, 0), (0, LANES - OUTPUT_SIZE)))          # (H, 128)
    w2_l1 = jnp.pad(w2[H:], ((0, 0), (0, LANES - OUTPUT_SIZE)))          # (H, 128)
    b2_p = jnp.pad(b2, ((0, 0), (0, LANES - OUTPUT_SIZE)))               # (1, 128)

    out = pl.pallas_call(
        lstm_model_kernel,
        out_shape=jax.ShapeDtypeStruct((Bp, LANES), jnp.float32),
    )(a_flat,
      wih0.astype(bf), whh0.astype(bf), bl0,
      wih1.astype(bf), whh1.astype(bf), bl1,
      w2_l0.astype(bf), w2_l1.astype(bf), b2_p)

    # predictions[:, -1] with output_size == 1 -> lane 0 of the padded output.
    return out[:batch, 0]


def reference_forward(x, params):
    """Pure-JAX f32 reference replicating the PyTorch forward (eval mode)."""
    (w1, b1, wih0, whh0, bl0, wih1, whh1, bl1, w2, b2) = params
    H = HIDDEN
    a = jnp.maximum(x @ w1 + b1, 0.0)                 # (batch, seq, H)

    def cell(carry, inp, wih, whh, b):
        h, c = carry
        gates = inp @ wih + h @ whh + b
        i = jax.nn.sigmoid(gates[:, 0 * H:1 * H])
        f = jax.nn.sigmoid(gates[:, 1 * H:2 * H])
        g = jnp.tanh(gates[:, 2 * H:3 * H])
        o = jax.nn.sigmoid(gates[:, 3 * H:4 * H])
        c_new = f * c + i * g
        h_new = o * jnp.tanh(c_new)
        return (h_new, c_new), h_new

    batch = x.shape[0]
    zero = jnp.zeros((batch, H), jnp.float32)

    def scan_layer(seq_in, wih, whh, b):
        def step(carry, xt):
            return cell(carry, xt, wih, whh, b)
        (h_f, _), outs = lax.scan(step, (zero, zero), seq_in)
        return h_f, outs

    seq_in = jnp.transpose(a, (1, 0, 2))              # (seq, batch, H)
    h0_f, outs0 = scan_layer(seq_in, wih0, whh0, bl0)
    h1_f, _ = scan_layer(outs0, wih1, whh1, bl1)
    h_cat = jnp.concatenate([h0_f, h1_f], axis=-1)    # (batch, 2H)
    pred = h_cat @ w2 + b2
    return pred[:, -1]


def make_params(key):
    ks = jax.random.split(key, 8)
    scale = 0.3
    w1 = scale * jax.random.normal(ks[0], (INPUT_SIZE, HIDDEN), jnp.float32)
    b1 = scale * jax.random.normal(ks[1], (1, HIDDEN), jnp.float32)
    wih0 = scale * jax.random.normal(ks[2], (HIDDEN, 4 * HIDDEN), jnp.float32)
    whh0 = scale * jax.random.normal(ks[3], (HIDDEN, 4 * HIDDEN), jnp.float32)
    bl0 = jnp.zeros((1, 4 * HIDDEN), jnp.float32)     # LSTM biases init to 0 (init_weights)
    wih1 = scale * jax.random.normal(ks[4], (HIDDEN, 4 * HIDDEN), jnp.float32)
    whh1 = scale * jax.random.normal(ks[5], (HIDDEN, 4 * HIDDEN), jnp.float32)
    bl1 = jnp.zeros((1, 4 * HIDDEN), jnp.float32)
    w2 = scale * jax.random.normal(ks[6], (NUM_LAYERS * HIDDEN, OUTPUT_SIZE), jnp.float32)
    b2 = scale * jax.random.normal(ks[7], (1, OUTPUT_SIZE), jnp.float32)
    return (w1, b1, wih0, whh0, bl0, wih1, whh1, bl1, w2, b2)


if __name__ == "__main__":
    key = jax.random.PRNGKey(0)
    k_x, k_p = jax.random.split(key)

    batch, seq = 4, 8
    x = jax.random.normal(k_x, (batch, seq, INPUT_SIZE), jnp.float32)
    params = make_params(k_p)

    out = lstm_model_forward(x, params)
    out = jax.block_until_ready(out)

    ref = reference_forward(x, params)
    assert out.shape == (batch,), out.shape
    # Tolerance covers bf16 MXU operands (f32 accumulation, f32 gate/state math).
    assert jnp.allclose(out, ref, atol=5e-2, rtol=5e-2), (out, ref)

    print("KERNEL_OK")
</pallas_src>

<mosaic_0001>
module attributes {stable_mosaic.version = 11 : i64} {
  func.func @lstm_model_kernel(%arg0: memref<64x32xf32, #tpu.memory_space<vmem>>, %arg1: memref<32x128xbf16, #tpu.memory_space<vmem>>, %arg2: memref<32x128xbf16, #tpu.memory_space<vmem>>, %arg3: memref<1x128xf32, #tpu.memory_space<vmem>>, %arg4: memref<32x128xbf16, #tpu.memory_space<vmem>>, %arg5: memref<32x128xbf16, #tpu.memory_space<vmem>>, %arg6: memref<1x128xf32, #tpu.memory_space<vmem>>, %arg7: memref<32x128xbf16, #tpu.memory_space<vmem>>, %arg8: memref<32x128xbf16, #tpu.memory_space<vmem>>, %arg9: memref<1x128xf32, #tpu.memory_space<vmem>>, %arg10: memref<8x128xf32, #tpu.memory_space<vmem>>) attributes {dimension_semantics = [], scalar_prefetch = 0 : i64, scratch_operands = 0 : i64, tpu.core_type = #tpu.core_type<tc>} {
    %c0 = arith.constant 0 : index
    %c0_0 = arith.constant 0 : index
    %0 = vector.load %arg0[%c0, %c0_0] : memref<64x32xf32, #tpu.memory_space<vmem>>, vector<64x32xf32>
    %1 = arith.truncf %0 : vector<64x32xf32> to vector<64x32xbf16>
    %c0_1 = arith.constant 0 : index
    %c0_2 = arith.constant 0 : index
    %2 = vector.load %arg1[%c0_1, %c0_2] : memref<32x128xbf16, #tpu.memory_space<vmem>>, vector<32x128xbf16>
    %cst = arith.constant dense<0.000000e+00> : vector<64x128xf32>
    %3 = tpu.matmul %1, %2, %cst {dimension_numbers = #tpu.dot_dimension_numbers<[1], [0], [0], [1], [0, 0, 1, 1], [], []>} : vector<64x32xbf16>, vector<32x128xbf16>, vector<64x128xf32> -> vector<64x128xf32>
    %c0_3 = arith.constant 0 : index
    %c0_4 = arith.constant 0 : index
    %4 = vector.load %arg3[%c0_3, %c0_4] : memref<1x128xf32, #tpu.memory_space<vmem>>, vector<1x128xf32>
    %5 = vector.broadcast %4 : vector<1x128xf32> to vector<64x128xf32>
    %6 = arith.addf %3, %5 : vector<64x128xf32>
    %c0_5 = arith.constant 0 : index
    %c0_6 = arith.constant 0 : index
    %7 = vector.load %arg2[%c0_5, %c0_6] : memref<32x128xbf16, #tpu.memory_space<vmem>>, vector<32x128xbf16>
    %c0_7 = arith.constant 0 : index
    %c0_8 = arith.constant 0 : index
    %8 = vector.load %arg4[%c0_7, %c0_8] : memref<32x128xbf16, #tpu.memory_space<vmem>>, vector<32x128xbf16>
    %c0_9 = arith.constant 0 : index
    %c0_10 = arith.constant 0 : index
    %9 = vector.load %arg5[%c0_9, %c0_10] : memref<32x128xbf16, #tpu.memory_space<vmem>>, vector<32x128xbf16>
    %c0_11 = arith.constant 0 : index
    %c0_12 = arith.constant 0 : index
    %10 = vector.load %arg6[%c0_11, %c0_12] : memref<1x128xf32, #tpu.memory_space<vmem>>, vector<1x128xf32>
    %11 = vector.shape_cast %10 : vector<1x128xf32> to vector<1x128xf32>
    %12 = vector.broadcast %11 : vector<1x128xf32> to vector<8x128xf32>
    %13 = tpu.iota {dimensions = array<i32: 1>} : vector<8x128xi32>
    %c64_i32 = arith.constant 64 : i32
    %14 = vector.broadcast %c64_i32 : i32 to vector<8x128xi32>
    %15 = arith.cmpi sge, %13, %14 : vector<8x128xi32>
    %c96_i32 = arith.constant 96 : i32
    %16 = vector.broadcast %c96_i32 : i32 to vector<8x128xi32>
    %17 = arith.cmpi slt, %13, %16 : vector<8x128xi32>
    %18 = arith.andi %15, %17 : vector<8x128xi1>
    %cst_13 = arith.constant 1.000000e+00 : f32
    %cst_14 = arith.constant 5.000000e-01 : f32
    %19 = vector.broadcast %cst_13 : f32 to vector<8x128xf32>
    %20 = vector.broadcast %cst_14 : f32 to vector<8x128xf32>
    %21 = arith.select %18, %19, %20 : vector<8x128xi1>, vector<8x128xf32>
    %cst_15 = arith.constant 0.000000e+00 : f32
    %cst_16 = arith.constant 5.000000e-01 : f32
    %22 = vector.broadcast %cst_15 : f32 to vector<8x128xf32>
    %23 = vector.broadcast %cst_16 : f32 to vector<8x128xf32>
    %24 = arith.select %18, %22, %23 : vector<8x128xi1>, vector<8x128xf32>
    %cst_17 = arith.constant 0.000000e+00 : f32
    %25 = vector.broadcast %cst_17 : f32 to vector<8x32xf32>
    %26 = vector.extract_strided_slice %6 {offsets = [0, 0], sizes = [8, 128], strides = [1, 1]} : vector<64x128xf32> to vector<8x128xf32>
    %27 = arith.truncf %25 : vector<8x32xf32> to vector<8x32xbf16>
    %cst_18 = arith.constant dense<0.000000e+00> : vector<8x128xf32>
    %28 = tpu.matmul %27, %9, %cst_18 {dimension_numbers = #tpu.dot_dimension_numbers<[1], [0], [0], [1], [0, 0, 1, 1], [], []>} : vector<8x32xbf16>, vector<32x128xbf16>, vector<8x128xf32> -> vector<8x128xf32>
    %29 = arith.truncf %25 : vector<8x32xf32> to vector<8x32xbf16>
    %cst_19 = arith.constant dense<0.000000e+00> : vector<8x128xf32>
    %30 = tpu.matmul %29, %7, %cst_19 {dimension_numbers = #tpu.dot_dimension_numbers<[1], [0], [0], [1], [0, 0, 1, 1], [], []>} : vector<8x32xbf16>, vector<32x128xbf16>, vector<8x128xf32> -> vector<8x128xf32>
    %31 = arith.addf %26, %30 : vector<8x128xf32>
    %32 = arith.mulf %31, %21 : vector<8x128xf32>
    %33 = math.tanh %32 : vector<8x128xf32>
    %34 = arith.mulf %33, %21 : vector<8x128xf32>
    %35 = arith.addf %34, %24 : vector<8x128xf32>
    %36 = vector.extract_strided_slice %35 {offsets = [0, 32], sizes = [8, 32], strides = [1, 1]} : vector<8x128xf32> to vector<8x32xf32>
    %37 = arith.mulf %36, %25 : vector<8x32xf32>
    %38 = vector.extract_strided_slice %35 {offsets = [0, 0], sizes = [8, 32], strides = [1, 1]} : vector<8x128xf32> to vector<8x32xf32>
    %39 = vector.extract_strided_slice %35 {offsets = [0, 64], sizes = [8, 32], strides = [1, 1]} : vector<8x128xf32> to vector<8x32xf32>
    %40 = arith.mulf %38, %39 : vector<8x32xf32>
    %41 = arith.addf %37, %40 : vector<8x32xf32>
    %42 = vector.extract_strided_slice %35 {offsets = [0, 96], sizes = [8, 32], strides = [1, 1]} : vector<8x128xf32> to vector<8x32xf32>
    %43 = math.tanh %41 : vector<8x32xf32>
    %44 = arith.mulf %42, %43 : vector<8x32xf32>
    %45 = arith.truncf %44 : vector<8x32xf32> to vector<8x32xbf16>
    %cst_20 = arith.constant dense<0.000000e+00> : vector<8x128xf32>
    %46 = tpu.matmul %45, %8, %cst_20 {dimension_numbers = #tpu.dot_dimension_numbers<[1], [0], [0], [1], [0, 0, 1, 1], [], []>} : vector<8x32xbf16>, vector<32x128xbf16>, vector<8x128xf32> -> vector<8x128xf32>
    %47 = arith.addf %46, %28 : vector<8x128xf32>
    %48 = arith.addf %47, %12 : vector<8x128xf32>
    %49 = arith.mulf %48, %21 : vector<8x128xf32>
    %50 = math.tanh %49 : vector<8x128xf32>
    %51 = arith.mulf %50, %21 : vector<8x128xf32>
    %52 = arith.addf %51, %24 : vector<8x128xf32>
    %53 = vector.extract_strided_slice %52 {offsets = [0, 32], sizes = [8, 32], strides = [1, 1]} : vector<8x128xf32> to vector<8x32xf32>
    %54 = arith.mulf %53, %25 : vector<8x32xf32>
    %55 = vector.extract_strided_slice %52 {offsets = [0, 0], sizes = [8, 32], strides = [1, 1]} : vector<8x128xf32> to vector<8x32xf32>
    %56 = vector.extract_strided_slice %52 {offsets = [0, 64], sizes = [8, 32], strides = [1, 1]} : vector<8x128xf32> to vector<8x32xf32>
    %57 = arith.mulf %55, %56 : vector<8x32xf32>
    %58 = arith.addf %54, %57 : vector<8x32xf32>
    %59 = vector.extract_strided_slice %52 {offsets = [0, 96], sizes = [8, 32], strides = [1, 1]} : vector<8x128xf32> to vector<8x32xf32>
    %60 = math.tanh %58 : vector<8x32xf32>
    %61 = arith.mulf %59, %60 : vector<8x32xf32>
    %62 = vector.extract_strided_slice %6 {offsets = [8, 0], sizes = [8, 128], strides = [1, 1]} : vector<64x128xf32> to vector<8x128xf32>
    %63 = arith.truncf %61 : vector<8x32xf32> to vector<8x32xbf16>
    %cst_21 = arith.constant dense<0.000000e+00> : vector<8x128xf32>
    %64 = tpu.matmul %63, %9, %cst_21 {dimension_numbers = #tpu.dot_dimension_numbers<[1], [0], [0], [1], [0, 0, 1, 1], [], []>} : vector<8x32xbf16>, vector<32x128xbf16>, vector<8x128xf32> -> vector<8x128xf32>
    %65 = arith.truncf %44 : vector<8x32xf32> to vector<8x32xbf16>
    %cst_22 = arith.constant dense<0.000000e+00> : vector<8x128xf32>
    %66 = tpu.matmul %65, %7, %cst_22 {dimension_numbers = #tpu.dot_dimension_numbers<[1], [0], [0], [1], [0, 0, 1, 1], [], []>} : vector<8x32xbf16>, vector<32x128xbf16>, vector<8x128xf32> -> vector<8x128xf32>
    %67 = arith.addf %62, %66 : vector<8x128xf32>
    %68 = arith.mulf %67, %21 : vector<8x128xf32>
    %69 = math.tanh %68 : vector<8x128xf32>
    %70 = arith.mulf %69, %21 : vector<8x128xf32>
    %71 = arith.addf %70, %24 : vector<8x128xf32>
    %72 = vector.extract_strided_slice %71 {offsets = [0, 32], sizes = [8, 32], strides = [1, 1]} : vector<8x128xf32> to vector<8x32xf32>
    %73 = arith.mulf %72, %41 : vector<8x32xf32>
    %74 = vector.extract_strided_slice %71 {offsets = [0, 0], sizes = [8, 32], strides = [1, 1]} : vector<8x128xf32> to vector<8x32xf32>
    %75 = vector.extract_strided_slice %71 {offsets = [0, 64], sizes = [8, 32], strides = [1, 1]} : vector<8x128xf32> to vector<8x32xf32>
    %76 = arith.mulf %74, %75 : vector<8x32xf32>
    %77 = arith.addf %73, %76 : vector<8x32xf32>
    %78 = vector.extract_strided_slice %71 {offsets = [0, 96], sizes = [8, 32], strides = [1, 1]} : vector<8x128xf32> to vector<8x32xf32>
    %79 = math.tanh %77 : vector<8x32xf32>
    %80 = arith.mulf %78, %79 : vector<8x32xf32>
    %81 = arith.truncf %80 : vector<8x32xf32> to vector<8x32xbf16>
    %cst_23 = arith.constant dense<0.000000e+00> : vector<8x128xf32>
    %82 = tpu.matmul %81, %8, %cst_23 {dimension_numbers = #tpu.dot_dimension_numbers<[1], [0], [0], [1], [0, 0, 1, 1], [], []>} : vector<8x32xbf16>, vector<32x128xbf16>, vector<8x128xf32> -> vector<8x128xf32>
    %83 = arith.addf %82, %64 : vector<8x128xf32>
    %84 = arith.addf %83, %12 : vector<8x128xf32>
    %85 = arith.mulf %84, %21 : vector<8x128xf32>
    %86 = math.tanh %85 : vector<8x128xf32>
    %87 = arith.mulf %86, %21 : vector<8x128xf32>
    %88 = arith.addf %87, %24 : vector<8x128xf32>
    %89 = vector.extract_strided_slice %88 {offsets = [0, 32], sizes = [8, 32], strides = [1, 1]} : vector<8x128xf32> to vector<8x32xf32>
    %90 = arith.mulf %89, %58 : vector<8x32xf32>
    %91 = vector.extract_strided_slice %88 {offsets = [0, 0], sizes = [8, 32], strides = [1, 1]} : vector<8x128xf32> to vector<8x32xf32>
    %92 = vector.extract_strided_slice %88 {offsets = [0, 64], sizes = [8, 32], strides = [1, 1]} : vector<8x128xf32> to vector<8x32xf32>
    %93 = arith.mulf %91, %92 : vector<8x32xf32>
    %94 = arith.addf %90, %93 : vector<8x32xf32>
    %95 = vector.extract_strided_slice %88 {offsets = [0, 96], sizes = [8, 32], strides = [1, 1]} : vector<8x128xf32> to vector<8x32xf32>
    %96 = math.tanh %94 : vector<8x32xf32>
    %97 = arith.mulf %95, %96 : vector<8x32xf32>
    %98 = vector.extract_strided_slice %6 {offsets = [16, 0], sizes = [8, 128], strides = [1, 1]} : vector<64x128xf32> to vector<8x128xf32>
    %99 = arith.truncf %97 : vector<8x32xf32> to vector<8x32xbf16>
    %cst_24 = arith.constant dense<0.000000e+00> : vector<8x128xf32>
    %100 = tpu.matmul %99, %9, %cst_24 {dimension_numbers = #tpu.dot_dimension_numbers<[1], [0], [0], [1], [0, 0, 1, 1], [], []>} : vector<8x32xbf16>, vector<32x128xbf16>, vector<8x128xf32> -> vector<8x128xf32>
    %101 = arith.truncf %80 : vector<8x32xf32> to vector<8x32xbf16>
    %cst_25 = arith.constant dense<0.000000e+00> : vector<8x128xf32>
    %102 = tpu.matmul %101, %7, %cst_25 {dimension_numbers = #tpu.dot_dimension_numbers<[1], [0], [0], [1], [0, 0, 1, 1], [], []>} : vector<8x32xbf16>, vector<32x128xbf16>, vector<8x128xf32> -> vector<8x128xf32>
    %103 = arith.addf %98, %102 : vector<8x128xf32>
    %104 = arith.mulf %103, %21 : vector<8x128xf32>
    %105 = math.tanh %104 : vector<8x128xf32>
    %106 = arith.mulf %105, %21 : vector<8x128xf32>
    %107 = arith.addf %106, %24 : vector<8x128xf32>
    %108 = vector.extract_strided_slice %107 {offsets = [0, 32], sizes = [8, 32], strides = [1, 1]} : vector<8x128xf32> to vector<8x32xf32>
    %109 = arith.mulf %108, %77 : vector<8x32xf32>
    %110 = vector.extract_strided_slice %107 {offsets = [0, 0], sizes = [8, 32], strides = [1, 1]} : vector<8x128xf32> to vector<8x32xf32>
    %111 = vector.extract_strided_slice %107 {offsets = [0, 64], sizes = [8, 32], strides = [1, 1]} : vector<8x128xf32> to vector<8x32xf32>
    %112 = arith.mulf %110, %111 : vector<8x32xf32>
    %113 = arith.addf %109, %112 : vector<8x32xf32>
    %114 = vector.extract_strided_slice %107 {offsets = [0, 96], sizes = [8, 32], strides = [1, 1]} : vector<8x128xf32> to vector<8x32xf32>
    %115 = math.tanh %113 : vector<8x32xf32>
    %116 = arith.mulf %114, %115 : vector<8x32xf32>
    %117 = arith.truncf %116 : vector<8x32xf32> to vector<8x32xbf16>
    %cst_26 = arith.constant dense<0.000000e+00> : vector<8x128xf32>
    %118 = tpu.matmul %117, %8, %cst_26 {dimension_numbers = #tpu.dot_dimension_numbers<[1], [0], [0], [1], [0, 0, 1, 1], [], []>} : vector<8x32xbf16>, vector<32x128xbf16>, vector<8x128xf32> -> vector<8x128xf32>
    %119 = arith.addf %118, %100 : vector<8x128xf32>
    %120 = arith.addf %119, %12 : vector<8x128xf32>
    %121 = arith.mulf %120, %21 : vector<8x128xf32>
    %122 = math.tanh %121 : vector<8x128xf32>
    %123 = arith.mulf %122, %21 : vector<8x128xf32>
    %124 = arith.addf %123, %24 : vector<8x128xf32>
    %125 = vector.extract_strided_slice %124 {offsets = [0, 32], sizes = [8, 32], strides = [1, 1]} : vector<8x128xf32> to vector<8x32xf32>
    %126 = arith.mulf %125, %94 : vector<8x32xf32>
    %127 = vector.extract_strided_slice %124 {offsets = [0, 0], sizes = [8, 32], strides = [1, 1]} : vector<8x128xf32> to vector<8x32xf32>
    %128 = vector.extract_strided_slice %124 {offsets = [0, 64], sizes = [8, 32], strides = [1, 1]} : vector<8x128xf32> to vector<8x32xf32>
    %129 = arith.mulf %127, %128 : vector<8x32xf32>
    %130 = arith.addf %126, %129 : vector<8x32xf32>
    %131 = vector.extract_strided_slice %124 {offsets = [0, 96], sizes = [8, 32], strides = [1, 1]} : vector<8x128xf32> to vector<8x32xf32>
    %132 = math.tanh %130 : vector<8x32xf32>
    %133 = arith.mulf %131, %132 : vector<8x32xf32>
    %134 = vector.extract_strided_slice %6 {offsets = [24, 0], sizes = [8, 128], strides = [1, 1]} : vector<64x128xf32> to vector<8x128xf32>
    %135 = arith.truncf %133 : vector<8x32xf32> to vector<8x32xbf16>
    %cst_27 = arith.constant dense<0.000000e+00> : vector<8x128xf32>
    %136 = tpu.matmul %135, %9, %cst_27 {dimension_numbers = #tpu.dot_dimension_numbers<[1], [0], [0], [1], [0, 0, 1, 1], [], []>} : vector<8x32xbf16>, vector<32x128xbf16>, vector<8x128xf32> -> vector<8x128xf32>
    %137 = arith.truncf %116 : vector<8x32xf32> to vector<8x32xbf16>
    %cst_28 = arith.constant dense<0.000000e+00> : vector<8x128xf32>
    %138 = tpu.matmul %137, %7, %cst_28 {dimension_numbers = #tpu.dot_dimension_numbers<[1], [0], [0], [1], [0, 0, 1, 1], [], []>} : vector<8x32xbf16>, vector<32x128xbf16>, vector<8x128xf32> -> vector<8x128xf32>
    %139 = arith.addf %134, %138 : vector<8x128xf32>
    %140 = arith.mulf %139, %21 : vector<8x128xf32>
    %141 = math.tanh %140 : vector<8x128xf32>
    %142 = arith.mulf %141, %21 : vector<8x128xf32>
    %143 = arith.addf %142, %24 : vector<8x128xf32>
    %144 = vector.extract_strided_slice %143 {offsets = [0, 32], sizes = [8, 32], strides = [1, 1]} : vector<8x128xf32> to vector<8x32xf32>
    %145 = arith.mulf %144, %113 : vector<8x32xf32>
    %146 = vector.extract_strided_slice %143 {offsets = [0, 0], sizes = [8, 32], strides = [1, 1]} : vector<8x128xf32> to vector<8x32xf32>
    %147 = vector.extract_strided_slice %143 {offsets = [0, 64], sizes = [8, 32], strides = [1, 1]} : vector<8x128xf32> to vector<8x32xf32>
    %148 = arith.mulf %146, %147 : vector<8x32xf32>
    %149 = arith.addf %145, %148 : vector<8x32xf32>
    %150 = vector.extract_strided_slice %143 {offsets = [0, 96], sizes = [8, 32], strides = [1, 1]} : vector<8x128xf32> to vector<8x32xf32>
    %151 = math.tanh %149 : vector<8x32xf32>
    %152 = arith.mulf %150, %151 : vector<8x32xf32>
    %153 = arith.truncf %152 : vector<8x32xf32> to vector<8x32xbf16>
    %cst_29 = arith.constant dense<0.000000e+00> : vector<8x128xf32>
    %154 = tpu.matmul %153, %8, %cst_29 {dimension_numbers = #tpu.dot_dimension_numbers<[1], [0], [0], [1], [0, 0, 1, 1], [], []>} : vector<8x32xbf16>, vector<32x128xbf16>, vector<8x128xf32> -> vector<8x128xf32>
    %155 = arith.addf %154, %136 : vector<8x128xf32>
    %156 = arith.addf %155, %12 : vector<8x128xf32>
    %157 = arith.mulf %156, %21 : vector<8x128xf32>
    %158 = math.tanh %157 : vector<8x128xf32>
    %159 = arith.mulf %158, %21 : vector<8x128xf32>
    %160 = arith.addf %159, %24 : vector<8x128xf32>
    %161 = vector.extract_strided_slice %160 {offsets = [0, 32], sizes = [8, 32], strides = [1, 1]} : vector<8x128xf32> to vector<8x32xf32>
    %162 = arith.mulf %161, %130 : vector<8x32xf32>
    %163 = vector.extract_strided_slice %160 {offsets = [0, 0], sizes = [8, 32], strides = [1, 1]} : vector<8x128xf32> to vector<8x32xf32>
    %164 = vector.extract_strided_slice %160 {offsets = [0, 64], sizes = [8, 32], strides = [1, 1]} : vector<8x128xf32> to vector<8x32xf32>
    %165 = arith.mulf %163, %164 : vector<8x32xf32>
    %166 = arith.addf %162, %165 : vector<8x32xf32>
    %167 = vector.extract_strided_slice %160 {offsets = [0, 96], sizes = [8, 32], strides = [1, 1]} : vector<8x128xf32> to vector<8x32xf32>
    %168 = math.tanh %166 : vector<8x32xf32>
    %169 = arith.mulf %167, %168 : vector<8x32xf32>
    %170 = vector.extract_strided_slice %6 {offsets = [32, 0], sizes = [8, 128], strides = [1, 1]} : vector<64x128xf32> to vector<8x128xf32>
    %171 = arith.truncf %169 : vector<8x32xf32> to vector<8x32xbf16>
    %cst_30 = arith.constant dense<0.000000e+00> : vector<8x128xf32>
    %172 = tpu.matmul %171, %9, %cst_30 {dimension_numbers = #tpu.dot_dimension_numbers<[1], [0], [0], [1], [0, 0, 1, 1], [], []>} : vector<8x32xbf16>, vector<32x128xbf16>, vector<8x128xf32> -> vector<8x128xf32>
    %173 = arith.truncf %152 : vector<8x32xf32> to vector<8x32xbf16>
    %cst_31 = arith.constant dense<0.000000e+00> : vector<8x128xf32>
    %174 = tpu.matmul %173, %7, %cst_31 {dimension_numbers = #tpu.dot_dimension_numbers<[1], [0], [0], [1], [0, 0, 1, 1], [], []>} : vector<8x32xbf16>, vector<32x128xbf16>, vector<8x128xf32> -> vector<8x128xf32>
    %175 = arith.addf %170, %174 : vector<8x128xf32>
    %176 = arith.mulf %175, %21 : vector<8x128xf32>
    %177 = math.tanh %176 : vector<8x128xf32>
    %178 = arith.mulf %177, %21 : vector<8x128xf32>
    %179 = arith.addf %178, %24 : vector<8x128xf32>
    %180 = vector.extract_strided_slice %179 {offsets = [0, 32], sizes = [8, 32], strides = [1, 1]} : vector<8x128xf32> to vector<8x32xf32>
    %181 = arith.mulf %180, %149 : vector<8x32xf32>
    %182 = vector.extract_strided_slice %179 {offsets = [0, 0], sizes = [8, 32], strides = [1, 1]} : vector<8x128xf32> to vector<8x32xf32>
    %183 = vector.extract_strided_slice %179 {offsets = [0, 64], sizes = [8, 32], strides = [1, 1]} : vector<8x128xf32> to vector<8x32xf32>
    %184 = arith.mulf %182, %183 : vector<8x32xf32>
    %185 = arith.addf %181, %184 : vector<8x32xf32>
    %186 = vector.extract_strided_slice %179 {offsets = [0, 96], sizes = [8, 32], strides = [1, 1]} : vector<8x128xf32> to vector<8x32xf32>
    %187 = math.tanh %185 : vector<8x32xf32>
    %188 = arith.mulf %186, %187 : vector<8x32xf32>
    %189 = arith.truncf %188 : vector<8x32xf32> to vector<8x32xbf16>
    %cst_32 = arith.constant dense<0.000000e+00> : vector<8x128xf32>
    %190 = tpu.matmul %189, %8, %cst_32 {dimension_numbers = #tpu.dot_dimension_numbers<[1], [0], [0], [1], [0, 0, 1, 1], [], []>} : vector<8x32xbf16>, vector<32x128xbf16>, vector<8x128xf32> -> vector<8x128xf32>
    %191 = arith.addf %190, %172 : vector<8x128xf32>
    %192 = arith.addf %191, %12 : vector<8x128xf32>
    %193 = arith.mulf %192, %21 : vector<8x128xf32>
    %194 = math.tanh %193 : vector<8x128xf32>
    %195 = arith.mulf %194, %21 : vector<8x128xf32>
    %196 = arith.addf %195, %24 : vector<8x128xf32>
    %197 = vector.extract_strided_slice %196 {offsets = [0, 32], sizes = [8, 32], strides = [1, 1]} : vector<8x128xf32> to vector<8x32xf32>
    %198 = arith.mulf %197, %166 : vector<8x32xf32>
    %199 = vector.extract_strided_slice %196 {offsets = [0, 0], sizes = [8, 32], strides = [1, 1]} : vector<8x128xf32> to vector<8x32xf32>
    %200 = vector.extract_strided_slice %196 {offsets = [0, 64], sizes = [8, 32], strides = [1, 1]} : vector<8x128xf32> to vector<8x32xf32>
    %201 = arith.mulf %199, %200 : vector<8x32xf32>
    %202 = arith.addf %198, %201 : vector<8x32xf32>
    %203 = vector.extract_strided_slice %196 {offsets = [0, 96], sizes = [8, 32], strides = [1, 1]} : vector<8x128xf32> to vector<8x32xf32>
    %204 = math.tanh %202 : vector<8x32xf32>
    %205 = arith.mulf %203, %204 : vector<8x32xf32>
    %206 = vector.extract_strided_slice %6 {offsets = [40, 0], sizes = [8, 128], strides = [1, 1]} : vector<64x128xf32> to vector<8x128xf32>
    %207 = arith.truncf %205 : vector<8x32xf32> to vector<8x32xbf16>
    %cst_33 = arith.constant dense<0.000000e+00> : vector<8x128xf32>
    %208 = tpu.matmul %207, %9, %cst_33 {dimension_numbers = #tpu.dot_dimension_numbers<[1], [0], [0], [1], [0, 0, 1, 1], [], []>} : vector<8x32xbf16>, vector<32x128xbf16>, vector<8x128xf32> -> vector<8x128xf32>
    %209 = arith.truncf %188 : vector<8x32xf32> to vector<8x32xbf16>
    %cst_34 = arith.constant dense<0.000000e+00> : vector<8x128xf32>
    %210 = tpu.matmul %209, %7, %cst_34 {dimension_numbers = #tpu.dot_dimension_numbers<[1], [0], [0], [1], [0, 0, 1, 1], [], []>} : vector<8x32xbf16>, vector<32x128xbf16>, vector<8x128xf32> -> vector<8x128xf32>
    %211 = arith.addf %206, %210 : vector<8x128xf32>
    %212 = arith.mulf %211, %21 : vector<8x128xf32>
    %213 = math.tanh %212 : vector<8x128xf32>
    %214 = arith.mulf %213, %21 : vector<8x128xf32>
    %215 = arith.addf %214, %24 : vector<8x128xf32>
    %216 = vector.extract_strided_slice %215 {offsets = [0, 32], sizes = [8, 32], strides = [1, 1]} : vector<8x128xf32> to vector<8x32xf32>
    %217 = arith.mulf %216, %185 : vector<8x32xf32>
    %218 = vector.extract_strided_slice %215 {offsets = [0, 0], sizes = [8, 32], strides = [1, 1]} : vector<8x128xf32> to vector<8x32xf32>
    %219 = vector.extract_strided_slice %215 {offsets = [0, 64], sizes = [8, 32], strides = [1, 1]} : vector<8x128xf32> to vector<8x32xf32>
    %220 = arith.mulf %218, %219 : vector<8x32xf32>
    %221 = arith.addf %217, %220 : vector<8x32xf32>
    %222 = vector.extract_strided_slice %215 {offsets = [0, 96], sizes = [8, 32], strides = [1, 1]} : vector<8x128xf32> to vector<8x32xf32>
    %223 = math.tanh %221 : vector<8x32xf32>
    %224 = arith.mulf %222, %223 : vector<8x32xf32>
    %225 = arith.truncf %224 : vector<8x32xf32> to vector<8x32xbf16>
    %cst_35 = arith.constant dense<0.000000e+00> : vector<8x128xf32>
    %226 = tpu.matmul %225, %8, %cst_35 {dimension_numbers = #tpu.dot_dimension_numbers<[1], [0], [0], [1], [0, 0, 1, 1], [], []>} : vector<8x32xbf16>, vector<32x128xbf16>, vector<8x128xf32> -> vector<8x128xf32>
    %227 = arith.addf %226, %208 : vector<8x128xf32>
    %228 = arith.addf %227, %12 : vector<8x128xf32>
    %229 = arith.mulf %228, %21 : vector<8x128xf32>
    %230 = math.tanh %229 : vector<8x128xf32>
    %231 = arith.mulf %230, %21 : vector<8x128xf32>
    %232 = arith.addf %231, %24 : vector<8x128xf32>
    %233 = vector.extract_strided_slice %232 {offsets = [0, 32], sizes = [8, 32], strides = [1, 1]} : vector<8x128xf32> to vector<8x32xf32>
    %234 = arith.mulf %233, %202 : vector<8x32xf32>
    %235 = vector.extract_strided_slice %232 {offsets = [0, 0], sizes = [8, 32], strides = [1, 1]} : vector<8x128xf32> to vector<8x32xf32>
    %236 = vector.extract_strided_slice %232 {offsets = [0, 64], sizes = [8, 32], strides = [1, 1]} : vector<8x128xf32> to vector<8x32xf32>
    %237 = arith.mulf %235, %236 : vector<8x32xf32>
    %238 = arith.addf %234, %237 : vector<8x32xf32>
    %239 = vector.extract_strided_slice %232 {offsets = [0, 96], sizes = [8, 32], strides = [1, 1]} : vector<8x128xf32> to vector<8x32xf32>
    %240 = math.tanh %238 : vector<8x32xf32>
    %241 = arith.mulf %239, %240 : vector<8x32xf32>
    %242 = vector.extract_strided_slice %6 {offsets = [48, 0], sizes = [8, 128], strides = [1, 1]} : vector<64x128xf32> to vector<8x128xf32>
    %243 = arith.truncf %241 : vector<8x32xf32> to vector<8x32xbf16>
    %cst_36 = arith.constant dense<0.000000e+00> : vector<8x128xf32>
    %244 = tpu.matmul %243, %9, %cst_36 {dimension_numbers = #tpu.dot_dimension_numbers<[1], [0], [0], [1], [0, 0, 1, 1], [], []>} : vector<8x32xbf16>, vector<32x128xbf16>, vector<8x128xf32> -> vector<8x128xf32>
    %245 = arith.truncf %224 : vector<8x32xf32> to vector<8x32xbf16>
    %cst_37 = arith.constant dense<0.000000e+00> : vector<8x128xf32>
    %246 = tpu.matmul %245, %7, %cst_37 {dimension_numbers = #tpu.dot_dimension_numbers<[1], [0], [0], [1], [0, 0, 1, 1], [], []>} : vector<8x32xbf16>, vector<32x128xbf16>, vector<8x128xf32> -> vector<8x128xf32>
    %247 = arith.addf %242, %246 : vector<8x128xf32>
    %248 = arith.mulf %247, %21 : vector<8x128xf32>
    %249 = math.tanh %248 : vector<8x128xf32>
    %250 = arith.mulf %249, %21 : vector<8x128xf32>
    %251 = arith.addf %250, %24 : vector<8x128xf32>
    %252 = vector.extract_strided_slice %251 {offsets = [0, 32], sizes = [8, 32], strides = [1, 1]} : vector<8x128xf32> to vector<8x32xf32>
    %253 = arith.mulf %252, %221 : vector<8x32xf32>
    %254 = vector.extract_strided_slice %251 {offsets = [0, 0], sizes = [8, 32], strides = [1, 1]} : vector<8x128xf32> to vector<8x32xf32>
    %255 = vector.extract_strided_slice %251 {offsets = [0, 64], sizes = [8, 32], strides = [1, 1]} : vector<8x128xf32> to vector<8x32xf32>
    %256 = arith.mulf %254, %255 : vector<8x32xf32>
    %257 = arith.addf %253, %256 : vector<8x32xf32>
    %258 = vector.extract_strided_slice %251 {offsets = [0, 96], sizes = [8, 32], strides = [1, 1]} : vector<8x128xf32> to vector<8x32xf32>
    %259 = math.tanh %257 : vector<8x32xf32>
    %260 = arith.mulf %258, %259 : vector<8x32xf32>
    %261 = arith.truncf %260 : vector<8x32xf32> to vector<8x32xbf16>
    %cst_38 = arith.constant dense<0.000000e+00> : vector<8x128xf32>
    %262 = tpu.matmul %261, %8, %cst_38 {dimension_numbers = #tpu.dot_dimension_numbers<[1], [0], [0], [1], [0, 0, 1, 1], [], []>} : vector<8x32xbf16>, vector<32x128xbf16>, vector<8x128xf32> -> vector<8x128xf32>
    %263 = arith.addf %262, %244 : vector<8x128xf32>
    %264 = arith.addf %263, %12 : vector<8x128xf32>
    %265 = arith.mulf %264, %21 : vector<8x128xf32>
    %266 = math.tanh %265 : vector<8x128xf32>
    %267 = arith.mulf %266, %21 : vector<8x128xf32>
    %268 = arith.addf %267, %24 : vector<8x128xf32>
    %269 = vector.extract_strided_slice %268 {offsets = [0, 32], sizes = [8, 32], strides = [1, 1]} : vector<8x128xf32> to vector<8x32xf32>
    %270 = arith.mulf %269, %238 : vector<8x32xf32>
    %271 = vector.extract_strided_slice %268 {offsets = [0, 0], sizes = [8, 32], strides = [1, 1]} : vector<8x128xf32> to vector<8x32xf32>
    %272 = vector.extract_strided_slice %268 {offsets = [0, 64], sizes = [8, 32], strides = [1, 1]} : vector<8x128xf32> to vector<8x32xf32>
    %273 = arith.mulf %271, %272 : vector<8x32xf32>
    %274 = arith.addf %270, %273 : vector<8x32xf32>
    %275 = vector.extract_strided_slice %268 {offsets = [0, 96], sizes = [8, 32], strides = [1, 1]} : vector<8x128xf32> to vector<8x32xf32>
    %276 = math.tanh %274 : vector<8x32xf32>
    %277 = arith.mulf %275, %276 : vector<8x32xf32>
    %278 = vector.extract_strided_slice %6 {offsets = [56, 0], sizes = [8, 128], strides = [1, 1]} : vector<64x128xf32> to vector<8x128xf32>
    %279 = arith.truncf %277 : vector<8x32xf32> to vector<8x32xbf16>
    %cst_39 = arith.constant dense<0.000000e+00> : vector<8x128xf32>
    %280 = tpu.matmul %279, %9, %cst_39 {dimension_numbers = #tpu.dot_dimension_numbers<[1], [0], [0], [1], [0, 0, 1, 1], [], []>} : vector<8x32xbf16>, vector<32x128xbf16>, vector<8x128xf32> -> vector<8x128xf32>
    %281 = arith.truncf %260 : vector<8x32xf32> to vector<8x32xbf16>
    %cst_40 = arith.constant dense<0.000000e+00> : vector<8x128xf32>
    %282 = tpu.matmul %281, %7, %cst_40 {dimension_numbers = #tpu.dot_dimension_numbers<[1], [0], [0], [1], [0, 0, 1, 1], [], []>} : vector<8x32xbf16>, vector<32x128xbf16>, vector<8x128xf32> -> vector<8x128xf32>
    %283 = arith.addf %278, %282 : vector<8x128xf32>
    %284 = arith.mulf %283, %21 : vector<8x128xf32>
    %285 = math.tanh %284 : vector<8x128xf32>
    %286 = arith.mulf %285, %21 : vector<8x128xf32>
    %287 = arith.addf %286, %24 : vector<8x128xf32>
    %288 = vector.extract_strided_slice %287 {offsets = [0, 32], sizes = [8, 32], strides = [1, 1]} : vector<8x128xf32> to vector<8x32xf32>
    %289 = arith.mulf %288, %257 : vector<8x32xf32>
    %290 = vector.extract_strided_slice %287 {offsets = [0, 0], sizes = [8, 32], strides = [1, 1]} : vector<8x128xf32> to vector<8x32xf32>
    %291 = vector.extract_strided_slice %287 {offsets = [0, 64], sizes = [8, 32], strides = [1, 1]} : vector<8x128xf32> to vector<8x32xf32>
    %292 = arith.mulf %290, %291 : vector<8x32xf32>
    %293 = arith.addf %289, %292 : vector<8x32xf32>
    %294 = vector.extract_strided_slice %287 {offsets = [0, 96], sizes = [8, 32], strides = [1, 1]} : vector<8x128xf32> to vector<8x32xf32>
    %295 = math.tanh %293 : vector<8x32xf32>
    %296 = arith.mulf %294, %295 : vector<8x32xf32>
    %297 = arith.truncf %296 : vector<8x32xf32> to vector<8x32xbf16>
    %cst_41 = arith.constant dense<0.000000e+00> : vector<8x128xf32>
    %298 = tpu.matmul %297, %8, %cst_41 {dimension_numbers = #tpu.dot_dimension_numbers<[1], [0], [0], [1], [0, 0, 1, 1], [], []>} : vector<8x32xbf16>, vector<32x128xbf16>, vector<8x128xf32> -> vector<8x128xf32>
    %299 = arith.addf %298, %280 : vector<8x128xf32>
    %300 = arith.addf %299, %12 : vector<8x128xf32>
    %301 = arith.mulf %300, %21 : vector<8x128xf32>
    %302 = math.tanh %301 : vector<8x128xf32>
    %303 = arith.mulf %302, %21 : vector<8x128xf32>
    %304 = arith.addf %303, %24 : vector<8x128xf32>
    %305 = vector.extract_strided_slice %304 {offsets = [0, 32], sizes = [8, 32], strides = [1, 1]} : vector<8x128xf32> to vector<8x32xf32>
    %306 = arith.mulf %305, %274 : vector<8x32xf32>
    %307 = vector.extract_strided_slice %304 {offsets = [0, 0], sizes = [8, 32], strides = [1, 1]} : vector<8x128xf32> to vector<8x32xf32>
    %308 = vector.extract_strided_slice %304 {offsets = [0, 64], sizes = [8, 32], strides = [1, 1]} : vector<8x128xf32> to vector<8x32xf32>
    %309 = arith.mulf %307, %308 : vector<8x32xf32>
    %310 = arith.addf %306, %309 : vector<8x32xf32>
    %311 = vector.extract_strided_slice %304 {offsets = [0, 96], sizes = [8, 32], strides = [1, 1]} : vector<8x128xf32> to vector<8x32xf32>
    %312 = math.tanh %310 : vector<8x32xf32>
    %313 = arith.mulf %311, %312 : vector<8x32xf32>
    %314 = arith.truncf %296 : vector<8x32xf32> to vector<8x32xbf16>
    %c0_42 = arith.constant 0 : index
    %c0_43 = arith.constant 0 : index
    %315 = vector.load %arg7[%c0_42, %c0_43] : memref<32x128xbf16, #tpu.memory_space<vmem>>, vector<32x128xbf16>
    %cst_44 = arith.constant dense<0.000000e+00> : vector<8x128xf32>
    %316 = tpu.matmul %314, %315, %cst_44 {dimension_numbers = #tpu.dot_dimension_numbers<[1], [0], [0], [1], [0, 0, 1, 1], [], []>} : vector<8x32xbf16>, vector<32x128xbf16>, vector<8x128xf32> -> vector<8x128xf32>
    %317 = arith.truncf %313 : vector<8x32xf32> to vector<8x32xbf16>
    %c0_45 = arith.constant 0 : index
    %c0_46 = arith.constant 0 : index
    %318 = vector.load %arg8[%c0_45, %c0_46] : memref<32x128xbf16, #tpu.memory_space<vmem>>, vector<32x128xbf16>
    %cst_47 = arith.constant dense<0.000000e+00> : vector<8x128xf32>
    %319 = tpu.matmul %317, %318, %cst_47 {dimension_numbers = #tpu.dot_dimension_numbers<[1], [0], [0], [1], [0, 0, 1, 1], [], []>} : vector<8x32xbf16>, vector<32x128xbf16>, vector<8x128xf32> -> vector<8x128xf32>
    %320 = arith.addf %316, %319 : vector<8x128xf32>
    %c0_48 = arith.constant 0 : index
    %c0_49 = arith.constant 0 : index
    %321 = vector.load %arg9[%c0_48, %c0_49] : memref<1x128xf32, #tpu.memory_space<vmem>>, vector<1x128xf32>
    %322 = vector.broadcast %321 : vector<1x128xf32> to vector<8x128xf32>
    %323 = arith.addf %320, %322 : vector<8x128xf32>
    %c0_50 = arith.constant 0 : index
    %c0_51 = arith.constant 0 : index
    %324 = vector.load %arg10[%c0_50, %c0_51] : memref<8x128xf32, #tpu.memory_space<vmem>>, vector<8x128xf32>
    tpu.vector_store %arg10[%c0_50, %c0_51], %323 {strides = array<i32>} : memref<8x128xf32, #tpu.memory_space<vmem>>, vector<8x128xf32>,
    return
  }
}

</mosaic_0001>

<llo_original>
// kernel: tpu_custom_call.1
$region0: #{tpu_custom_call.1}
  #allocation0 [shape = 'u32[]', space=smem, size = 0x4, offset = 0x4, fixed_abs, tag = 'smem constant byte address 0x4 - core index']
  #allocation1 [shape = 'u32[72,128]{1,0:T(1,128)}', space=vmem, size = 0x9000, scoped, tag = 'internal scratch']
  %s0 = inlined_call_operand.vmem [shape: f32[64,32], index: 0, kind: input, shape index: {}]
  %s1 = inlined_call_operand.vmem [shape: bf16[32,128], index: 1, kind: input, shape index: {}]
  %s2 = inlined_call_operand.vmem [shape: bf16[32,128], index: 2, kind: input, shape index: {}]
  %s3 = inlined_call_operand.vmem [shape: f32[1,128], index: 3, kind: input, shape index: {}]
  %s4 = inlined_call_operand.vmem [shape: bf16[32,128], index: 4, kind: input, shape index: {}]
  %s5 = inlined_call_operand.vmem [shape: bf16[32,128], index: 5, kind: input, shape index: {}]
  %s6 = inlined_call_operand.vmem [shape: f32[1,128], index: 6, kind: input, shape index: {}]
  %s7 = inlined_call_operand.vmem [shape: bf16[32,128], index: 7, kind: input, shape index: {}]
  %s8 = inlined_call_operand.vmem [shape: bf16[32,128], index: 8, kind: input, shape index: {}]
  %s9 = inlined_call_operand.vmem [shape: f32[1,128], index: 9, kind: input, shape index: {}]
  %s10 = inlined_call_operand.hbm [shape: f32[8,128], index: 10, kind: output, shape index: {}]
  %s11 = sld [smem:[#allocation0]]
  $region50: #{tpu_custom_call.1} parent=0
    _
  %s13 = ssub.s32 1, %s11
  %s14 = scalar_select 0, %s13, %s11
  $region1: #{tpu_custom_call.1} parent=0
    #allocation2 [shape = 'u8[4096]{0}', space=vmem, size = 0x1000, scoped, tag = 'output window, operand 0, single buffered']
    #allocation3 [shape = 's32[1]{0}', space=sflag, size = 0x4, scoped, tag = 'scoped memory for tpu_custom_call.1']
    %15 = vsyncpa [#allocation3], 0
    // Predicated region
    $region2: #{tpu_custom_call.1} parent=1 // pred_check
      _
    $region3: #{tpu_custom_call.1} parent=1 // pred_check_branch
      %17 = sbr.rel (0) target = $region5
    $region4: #{tpu_custom_call.1} parent=1 // pred_region
      _
    $region5: #{tpu_custom_call.1} parent=1 // pred_fallthru
      _
    // Predicated region
    $region6: #{tpu_custom_call.1} parent=1 // pred_check
      _
    $region7: #{tpu_custom_call.1} parent=1 // pred_check_branch
      %19 = sbr.rel (0) target = $region9
    $region8: #{tpu_custom_call.1} parent=1 // pred_region
      _
    $region9: #{tpu_custom_call.1} parent=1 // pred_fallthru
      _
    // Predicated region
    $region10: #{tpu_custom_call.1} parent=1 // pred_check
      _
    $region11: #{tpu_custom_call.1} parent=1 // pred_check_branch
      %21 = sbr.rel (0) target = $region13
    $region12: #{tpu_custom_call.1} parent=1 // pred_region
      _
    $region13: #{tpu_custom_call.1} parent=1 // pred_fallthru
      _
    // Predicated region
    $region14: #{tpu_custom_call.1} parent=1 // pred_check
      _
    $region15: #{tpu_custom_call.1} parent=1 // pred_check_branch
      %23 = sbr.rel (0) target = $region17
    $region16: #{tpu_custom_call.1} parent=1 // pred_region
      _
    $region17: #{tpu_custom_call.1} parent=1 // pred_fallthru
      _
    // Predicated region
    $region18: #{tpu_custom_call.1} parent=1 // pred_check
      _
    $region19: #{tpu_custom_call.1} parent=1 // pred_check_branch
      %25 = sbr.rel (0) target = $region21
    $region20: #{tpu_custom_call.1} parent=1 // pred_region
      _
    $region21: #{tpu_custom_call.1} parent=1 // pred_fallthru
      _
    // Predicated region
    $region22: #{tpu_custom_call.1} parent=1 // pred_check
      _
    $region23: #{tpu_custom_call.1} parent=1 // pred_check_branch
      %27 = sbr.rel (0) target = $region25
    $region24: #{tpu_custom_call.1} parent=1 // pred_region
      _
    $region25: #{tpu_custom_call.1} parent=1 // pred_fallthru
      _
    // Predicated region
    $region26: #{tpu_custom_call.1} parent=1 // pred_check
      _
    $region27: #{tpu_custom_call.1} parent=1 // pred_check_branch
      %29 = sbr.rel (0) target = $region29
    $region28: #{tpu_custom_call.1} parent=1 // pred_region
      _
    $region29: #{tpu_custom_call.1} parent=1 // pred_fallthru
      _
    // Predicated region
    $region30: #{tpu_custom_call.1} parent=1 // pred_check
      _
    $region31: #{tpu_custom_call.1} parent=1 // pred_check_branch
      %31 = sbr.rel (0) target = $region33
    $region32: #{tpu_custom_call.1} parent=1 // pred_region
      _
    $region33: #{tpu_custom_call.1} parent=1 // pred_fallthru
      _
    // Predicated region
    $region34: #{tpu_custom_call.1} parent=1 // pred_check
      _
    $region35: #{tpu_custom_call.1} parent=1 // pred_check_branch
      %33 = sbr.rel (0) target = $region37
    $region36: #{tpu_custom_call.1} parent=1 // pred_region
      _
    $region37: #{tpu_custom_call.1} parent=1 // pred_fallthru
      _
    // Predicated region
    $region38: #{tpu_custom_call.1} parent=1 // pred_check
      _
    $region39: #{tpu_custom_call.1} parent=1 // pred_check_branch
      %35 = sbr.rel (0) target = $region41
    $region40: #{tpu_custom_call.1} parent=1 // pred_region
      _
    $region41: #{tpu_custom_call.1} parent=1 // pred_fallthru
      _
    %v37 = vld [vmem:[%s0] sm:$0xff]
    %v38 = vld [vmem:[%s0 + $0x8] sm:$0xff]
    %v39 = vld [vmem:[%s0 + $0x10] sm:$0xff]
    %v40 = vld [vmem:[%s0 + $0x18] sm:$0xff]
    %v41 = vld [vmem:[%s0 + $0x20] sm:$0xff]
    %v42 = vld [vmem:[%s0 + $0x28] sm:$0xff]
    %v43 = vld [vmem:[%s0 + $0x30] sm:$0xff]
    %v44 = vld [vmem:[%s0 + $0x38] sm:$0xff]
    %v45 = vpack.c.bf16 %v38, %v37
    %v46 = vpack.c.bf16 %v40, %v39
    %v47 = vpack.c.bf16 %v42, %v41
    %v48 = vpack.c.bf16 %v44, %v43
    %v49 = vld [vmem:[%s1] sm:$0xf]
    %v50 = vld [vmem:[%s1 + $0x4] sm:$0xf]
    %v51 = vld [vmem:[%s1 + $0x8] sm:$0xf]
    %v52 = vld [vmem:[%s1 + $0xc] sm:$0xf]
    %v53 = vld [vmem:[%s3] sm:$0x1]
    %v55 = vperm.slane %v53, 0
    %v61 = vunpack.c.l.b16 %v49
    %v62 = vunpack.c.l.b16 %v50
    %v63 = vunpack.c.l.b16 %v51
    %v64 = vunpack.c.l.b16 %v52
    %v65 = vpack.c.b16 %v62, %v61
    %v66 = vpack.c.b16 %v64, %v63
    %vm69 = vcmask 261120
    %v71 = vsel %vm69, %v45, 0
    %v74 = vsel %vm69, %v46, 0
    %v77 = vsel %vm69, %v47, 0
    %v80 = vsel %vm69, %v48, 0
    %82 = vmatpush.bf16.msra.mxu0 0
    %83 = vmatpush.bf16.msra.mxu0 0
    %84 = vmatpush.bf16.msra.mxu0 0
    %85 = vmatpush.bf16.msra.mxu0 0
    %86 = vmatpush.bf16.msra.mxu0 0
    %87 = vmatpush.bf16.msra.mxu0 0
    %88 = vmatpush.bf16.msra.mxu0 %v66
    %89 = vmatpush.bf16.msra.mxu0 %v65
    %90 = vmatmul.bf16.gmra.mxu0 %v71
    %v91 = vpop.f32.mrf.mxu0
    %v92 = vadd.f32 %v55, %v91
    %v93 = vpop.f32.mrf.mxu0
    %v94 = vadd.f32 %v55, %v93
    %95 = vmatmul.bf16.gmra.mxu0 %v74
    %v96 = vpop.f32.mrf.mxu0
    %v97 = vadd.f32 %v55, %v96
    %v98 = vpop.f32.mrf.mxu0
    %v99 = vadd.f32 %v55, %v98
    %100 = vmatmul.bf16.gmra.mxu0 %v77
    %v101 = vpop.f32.mrf.mxu0
    %v102 = vadd.f32 %v55, %v101
    %v103 = vpop.f32.mrf.mxu0
    %v104 = vadd.f32 %v55, %v103
    %105 = vmatmul.bf16.gmra.mxu0 %v80
    %v106 = vpop.f32.mrf.mxu0
    %v107 = vadd.f32 %v55, %v106
    %v108 = vpop.f32.mrf.mxu0
    %v109 = vadd.f32 %v55, %v108
    %110 = vdwg.mxu0
    %v111 = vld [vmem:[%s2] sm:$0xf]
    %v112 = vld [vmem:[%s2 + $0x4] sm:$0xf]
    %v113 = vld [vmem:[%s2 + $0x8] sm:$0xf]
    %v114 = vld [vmem:[%s2 + $0xc] sm:$0xf]
    %v115 = vld [vmem:[%s4] sm:$0xf]
    %v116 = vld [vmem:[%s4 + $0x4] sm:$0xf]
    %v117 = vld [vmem:[%s4 + $0x8] sm:$0xf]
    %v118 = vld [vmem:[%s4 + $0xc] sm:$0xf]
    %v119 = vld [vmem:[%s5] sm:$0xf]
    %v120 = vld [vmem:[%s5 + $0x4] sm:$0xf]
    %v121 = vld [vmem:[%s5 + $0x8] sm:$0xf]
    %v122 = vld [vmem:[%s5 + $0xc] sm:$0xf]
    %v123 = vld [vmem:[%s6] sm:$0x1]
    %v125 = vperm.slane %v123, 0
    %v127 = vlaneseq
    %v128 = vand.u32 %v127, 127
    %vm129 = vcmp.ge.s32.totalorder %v128, 64
    %vm130 = vcmp.lt.s32.totalorder %v128, 96
    %vm131 = vmand %vm129, %vm130
    %v132 = vsel %vm131, 1.0, 0.5
    %v133 = vsel %vm131, 0.0, 0.5
    %v138 = vunpack.c.l.b16 %v119
    %v139 = vunpack.c.l.b16 %v120
    %v140 = vunpack.c.l.b16 %v121
    %v141 = vunpack.c.l.b16 %v122
    %v142 = vpack.c.b16 %v139, %v138
    %v143 = vpack.c.b16 %v141, %v140
    %v147 = vsel %vm69, 0, 0
    %149 = vmatpush.bf16.msra.mxu0 0
    %150 = vmatpush.bf16.msra.mxu0 0
    %151 = vmatpush.bf16.msra.mxu0 0
    %152 = vmatpush.bf16.msra.mxu0 0
    %153 = vmatpush.bf16.msra.mxu0 0
    %154 = vmatpush.bf16.msra.mxu0 0
    %155 = vmatpush.bf16.msra.mxu0 %v143
    %156 = vmatpush.bf16.msra.mxu0 %v142
    %157 = vmatmul.bf16.gmra.mxu0 %v147
    %v158 = vpop.f32.mrf.mxu0
    %v159 = vadd.f32 0.0, %v158
    %v160 = vpop.f32.mrf.mxu0
    %161 = vdwg.mxu0
    %v166 = vunpack.c.l.b16 %v111
    %v167 = vunpack.c.l.b16 %v112
    %v168 = vunpack.c.l.b16 %v113
    %v169 = vunpack.c.l.b16 %v114
    %v170 = vpack.c.b16 %v167, %v166
    %v171 = vpack.c.b16 %v169, %v168
    %174 = vmatpush.bf16.msra.mxu0 0
    %175 = vmatpush.bf16.msra.mxu0 0
    %176 = vmatpush.bf16.msra.mxu0 0
    %177 = vmatpush.bf16.msra.mxu0 0
    %178 = vmatpush.bf16.msra.mxu0 0
    %179 = vmatpush.bf16.msra.mxu0 0
    %180 = vmatpush.bf16.msra.mxu0 %v171
    %181 = vmatpush.bf16.msra.mxu0 %v170
    %182 = vmatmul.bf16.gmra.mxu0 %v147
    %v183 = vpop.f32.mrf.mxu0
    %v184 = vadd.f32 0.0, %v183
    %v185 = vpop.f32.mrf.mxu0
    %186 = vdwg.mxu0
    %v187 = vadd.f32 %v92, %v184
    %v188 = vmul.f32 %v187, %v132
    %v189 = vtanh.pop %v188
    %v190 = vmul.f32 %v189, %v132
    %v191 = vadd.f32 %v190, %v133
    %v192 = vmul.f32 %v191, 0.0
    %194 = vrot.lane.b32.xlu0 %v191, 64
    %v195 = vpop.permute.xlu0 %194
    %v197 = vmul.f32 %v191, %v195
    %199 = vrot.lane.b32.xlu0 %v197, 32
    %v200 = vpop.permute.xlu0 %199
    %v202 = vadd.f32 %v192, %v200
    %v203 = vtanh.pop %v202
    %205 = vrot.lane.b32.xlu0 %v203, 64
    %v206 = vpop.permute.xlu0 %205
    %v208 = vmul.f32 %v191, %v206
    %v209 = vpack.c.bf16 %v208, %v208
    %211 = vrot.lane.b32.xlu0 %v209, 32
    %v212 = vpop.permute.xlu0 %211
    %v217 = vunpack.c.l.b16 %v115
    %v218 = vunpack.c.l.b16 %v116
    %v219 = vunpack.c.l.b16 %v117
    %v220 = vunpack.c.l.b16 %v118
    %v221 = vpack.c.b16 %v218, %v217
    %v222 = vpack.c.b16 %v220, %v219
    %v226 = vsel %vm69, %v212, 0
    %228 = vmatpush.bf16.msra.mxu0 0
    %229 = vmatpush.bf16.msra.mxu0 0
    %230 = vmatpush.bf16.msra.mxu0 0
    %231 = vmatpush.bf16.msra.mxu0 0
    %232 = vmatpush.bf16.msra.mxu0 0
    %233 = vmatpush.bf16.msra.mxu0 0
    %234 = vmatpush.bf16.msra.mxu0 %v222
    %235 = vmatpush.bf16.msra.mxu0 %v221
    %236 = vmatmul.bf16.gmra.mxu0 %v226
    %v237 = vpop.f32.mrf.mxu0
    %v238 = vadd.f32 %v159, %v237
    %v239 = vpop.f32.mrf.mxu0
    %240 = vdwg.mxu0
    %v241 = vadd.f32 %v238, %v125
    %v242 = vmul.f32 %v241, %v132
    %v243 = vtanh.pop %v242
    %v244 = vmul.f32 %v243, %v132
    %v245 = vadd.f32 %v244, %v133
    %v246 = vmul.f32 %v245, 0.0
    %248 = vrot.lane.b32.xlu0 %v245, 64
    %v249 = vpop.permute.xlu0 %248
    %v251 = vmul.f32 %v245, %v249
    %253 = vrot.lane.b32.xlu0 %v251, 32
    %v254 = vpop.permute.xlu0 %253
    %v256 = vadd.f32 %v246, %v254
    %v257 = vtanh.pop %v256
    %259 = vrot.lane.b32.xlu0 %v257, 64
    %v260 = vpop.permute.xlu0 %259
    %v262 = vmul.f32 %v245, %v260
    %v263 = vpack.c.bf16 %v262, %v262
    %265 = vrot.lane.b32.xlu0 %v263, 32
    %v266 = vpop.permute.xlu0 %265
    %v268 = vsel %vm69, %v266, 0
    %270 = vmatpush.bf16.msra.mxu0 0
    %271 = vmatpush.bf16.msra.mxu0 0
    %272 = vmatpush.bf16.msra.mxu0 0
    %273 = vmatpush.bf16.msra.mxu0 0
    %274 = vmatpush.bf16.msra.mxu0 0
    %275 = vmatpush.bf16.msra.mxu0 0
    %276 = vmatpush.bf16.msra.mxu0 %v143
    %277 = vmatpush.bf16.msra.mxu0 %v142
    %278 = vmatmul.bf16.gmra.mxu0 %v268
    %v279 = vpop.f32.mrf.mxu0
    %v280 = vadd.f32 0.0, %v279
    %v281 = vpop.f32.mrf.mxu0
    %282 = vdwg.mxu0
    %283 = vmatpush.bf16.msra.mxu0 0
    %284 = vmatpush.bf16.msra.mxu0 0
    %285 = vmatpush.bf16.msra.mxu0 0
    %286 = vmatpush.bf16.msra.mxu0 0
    %287 = vmatpush.bf16.msra.mxu0 0
    %288 = vmatpush.bf16.msra.mxu0 0
    %289 = vmatpush.bf16.msra.mxu0 %v171
    %290 = vmatpush.bf16.msra.mxu0 %v170
    %291 = vmatmul.bf16.gmra.mxu0 %v226
    %v292 = vpop.f32.mrf.mxu0
    %v293 = vadd.f32 0.0, %v292
    %v294 = vpop.f32.mrf.mxu0
    %295 = vdwg.mxu0
    %v296 = vadd.f32 %v94, %v293
    %v297 = vmul.f32 %v296, %v132
    %v298 = vtanh.pop %v297
    %v299 = vmul.f32 %v298, %v132
    %v300 = vadd.f32 %v299, %v133
    %v301 = vmul.f32 %v300, %v202
    %303 = vrot.lane.b32.xlu0 %v300, 64
    %v304 = vpop.permute.xlu0 %303
    %v306 = vmul.f32 %v300, %v304
    %308 = vrot.lane.b32.xlu0 %v306, 32
    %v309 = vpop.permute.xlu0 %308
    %v311 = vadd.f32 %v301, %v309
    %v312 = vtanh.pop %v311
    %314 = vrot.lane.b32.xlu0 %v312, 64
    %v315 = vpop.permute.xlu0 %314
    %v317 = vmul.f32 %v300, %v315
    %v318 = vpack.c.bf16 %v317, %v317
    %320 = vrot.lane.b32.xlu0 %v318, 32
    %v321 = vpop.permute.xlu0 %320
    %v323 = vsel %vm69, %v321, 0
    %325 = vmatpush.bf16.msra.mxu0 0
    %326 = vmatpush.bf16.msra.mxu0 0
    %327 = vmatpush.bf16.msra.mxu0 0
    %328 = vmatpush.bf16.msra.mxu0 0
    %329 = vmatpush.bf16.msra.mxu0 0
    %330 = vmatpush.bf16.msra.mxu0 0
    %331 = vmatpush.bf16.msra.mxu0 %v222
    %332 = vmatpush.bf16.msra.mxu0 %v221
    %333 = vmatmul.bf16.gmra.mxu0 %v323
    %v334 = vpop.f32.mrf.mxu0
    %v335 = vadd.f32 %v280, %v334
    %v336 = vpop.f32.mrf.mxu0
    %337 = vdwg.mxu0
    %v338 = vadd.f32 %v335, %v125
    %v339 = vmul.f32 %v338, %v132
    %v340 = vtanh.pop %v339
    %v341 = vmul.f32 %v340, %v132
    %v342 = vadd.f32 %v341, %v133
    %v343 = vmul.f32 %v342, %v256
    %345 = vrot.lane.b32.xlu0 %v342, 64
    %v346 = vpop.permute.xlu0 %345
    %v348 = vmul.f32 %v342, %v346
    %350 = vrot.lane.b32.xlu0 %v348, 32
    %v351 = vpop.permute.xlu0 %350
    %v353 = vadd.f32 %v343, %v351
    %v354 = vtanh.pop %v353
    %356 = vrot.lane.b32.xlu0 %v354, 64
    %v357 = vpop.permute.xlu0 %356
    %v359 = vmul.f32 %v342, %v357
    %v360 = vpack.c.bf16 %v359, %v359
    %362 = vrot.lane.b32.xlu0 %v360, 32
    %v363 = vpop.permute.xlu0 %362
    %v365 = vsel %vm69, %v363, 0
    %367 = vmatpush.bf16.msra.mxu0 0
    %368 = vmatpush.bf16.msra.mxu0 0
    %369 = vmatpush.bf16.msra.mxu0 0
    %370 = vmatpush.bf16.msra.mxu0 0
    %371 = vmatpush.bf16.msra.mxu0 0
    %372 = vmatpush.bf16.msra.mxu0 0
    %373 = vmatpush.bf16.msra.mxu0 %v143
    %374 = vmatpush.bf16.msra.mxu0 %v142
    %375 = vmatmul.bf16.gmra.mxu0 %v365
    %v376 = vpop.f32.mrf.mxu0
    %v377 = vadd.f32 0.0, %v376
    %v378 = vpop.f32.mrf.mxu0
    %379 = vdwg.mxu0
    %380 = vmatpush.bf16.msra.mxu0 0
    %381 = vmatpush.bf16.msra.mxu0 0
    %382 = vmatpush.bf16.msra.mxu0 0
    %383 = vmatpush.bf16.msra.mxu0 0
    %384 = vmatpush.bf16.msra.mxu0 0
    %385 = vmatpush.bf16.msra.mxu0 0
    %386 = vmatpush.bf16.msra.mxu0 %v171
    %387 = vmatpush.bf16.msra.mxu0 %v170
    %388 = vmatmul.bf16.gmra.mxu0 %v323
    %v389 = vpop.f32.mrf.mxu0
    %v390 = vadd.f32 0.0, %v389
    %v391 = vpop.f32.mrf.mxu0
    %392 = vdwg.mxu0
    %v393 = vadd.f32 %v97, %v390
    %v394 = vmul.f32 %v393, %v132
    %v395 = vtanh.pop %v394
    %v396 = vmul.f32 %v395, %v132
    %v397 = vadd.f32 %v396, %v133
    %v398 = vmul.f32 %v397, %v311
    %400 = vrot.lane.b32.xlu0 %v397, 64
    %v401 = vpop.permute.xlu0 %400
    %v403 = vmul.f32 %v397, %v401
    %405 = vrot.lane.b32.xlu0 %v403, 32
    %v406 = vpop.permute.xlu0 %405
    %v408 = vadd.f32 %v398, %v406
    %v409 = vtanh.pop %v408
    %411 = vrot.lane.b32.xlu0 %v409, 64
    %v412 = vpop.permute.xlu0 %411
    %v414 = vmul.f32 %v397, %v412
    %v415 = vpack.c.bf16 %v414, %v414
    %417 = vrot.lane.b32.xlu0 %v415, 32
    %v418 = vpop.permute.xlu0 %417
    %v420 = vsel %vm69, %v418, 0
    %422 = vmatpush.bf16.msra.mxu0 0
    %423 = vmatpush.bf16.msra.mxu0 0
    %424 = vmatpush.bf16.msra.mxu0 0
    %425 = vmatpush.bf16.msra.mxu0 0
    %426 = vmatpush.bf16.msra.mxu0 0
    %427 = vmatpush.bf16.msra.mxu0 0
    %428 = vmatpush.bf16.msra.mxu0 %v222
    %429 = vmatpush.bf16.msra.mxu0 %v221
    %430 = vmatmul.bf16.gmra.mxu0 %v420
    %v431 = vpop.f32.mrf.mxu0
    %v432 = vadd.f32 %v377, %v431
    %v433 = vpop.f32.mrf.mxu0
    %434 = vdwg.mxu0
    %v435 = vadd.f32 %v432, %v125
    %v436 = vmul.f32 %v435, %v132
    %v437 = vtanh.pop %v436
    %v438 = vmul.f32 %v437, %v132
    %v439 = vadd.f32 %v438, %v133
    %v440 = vmul.f32 %v439, %v353
    %442 = vrot.lane.b32.xlu0 %v439, 64
    %v443 = vpop.permute.xlu0 %442
    %v445 = vmul.f32 %v439, %v443
    %447 = vrot.lane.b32.xlu0 %v445, 32
    %v448 = vpop.permute.xlu0 %447
    %v450 = vadd.f32 %v440, %v448
    %v451 = vtanh.pop %v450
    %453 = vrot.lane.b32.xlu0 %v451, 64
    %v454 = vpop.permute.xlu0 %453
    %v456 = vmul.f32 %v439, %v454
    %v457 = vpack.c.bf16 %v456, %v456
    %459 = vrot.lane.b32.xlu0 %v457, 32
    %v460 = vpop.permute.xlu0 %459
    %v462 = vsel %vm69, %v460, 0
    %464 = vmatpush.bf16.msra.mxu0 0
    %465 = vmatpush.bf16.msra.mxu0 0
    %466 = vmatpush.bf16.msra.mxu0 0
    %467 = vmatpush.bf16.msra.mxu0 0
    %468 = vmatpush.bf16.msra.mxu0 0
    %469 = vmatpush.bf16.msra.mxu0 0
    %470 = vmatpush.bf16.msra.mxu0 %v143
    %471 = vmatpush.bf16.msra.mxu0 %v142
    %472 = vmatmul.bf16.gmra.mxu0 %v462
    %v473 = vpop.f32.mrf.mxu0
    %v474 = vadd.f32 0.0, %v473
    %v475 = vpop.f32.mrf.mxu0
    %476 = vdwg.mxu0
    %477 = vmatpush.bf16.msra.mxu0 0
    %478 = vmatpush.bf16.msra.mxu0 0
    %479 = vmatpush.bf16.msra.mxu0 0
    %480 = vmatpush.bf16.msra.mxu0 0
    %481 = vmatpush.bf16.msra.mxu0 0
    %482 = vmatpush.bf16.msra.mxu0 0
    %483 = vmatpush.bf16.msra.mxu0 %v171
    %484 = vmatpush.bf16.msra.mxu0 %v170
    %485 = vmatmul.bf16.gmra.mxu0 %v420
    %v486 = vpop.f32.mrf.mxu0
    %v487 = vadd.f32 0.0, %v486
    %v488 = vpop.f32.mrf.mxu0
    %489 = vdwg.mxu0
    %v490 = vadd.f32 %v99, %v487
    %v491 = vmul.f32 %v490, %v132
    %v492 = vtanh.pop %v491
    %v493 = vmul.f32 %v492, %v132
    %v494 = vadd.f32 %v493, %v133
    %v495 = vmul.f32 %v494, %v408
    %497 = vrot.lane.b32.xlu0 %v494, 64
    %v498 = vpop.permute.xlu0 %497
    %v500 = vmul.f32 %v494, %v498
    %502 = vrot.lane.b32.xlu0 %v500, 32
    %v503 = vpop.permute.xlu0 %502
    %v505 = vadd.f32 %v495, %v503
    %v506 = vtanh.pop %v505
    %508 = vrot.lane.b32.xlu0 %v506, 64
    %v509 = vpop.permute.xlu0 %508
    %v511 = vmul.f32 %v494, %v509
    %v512 = vpack.c.bf16 %v511, %v511
    %514 = vrot.lane.b32.xlu0 %v512, 32
    %v515 = vpop.permute.xlu0 %514
    %v517 = vsel %vm69, %v515, 0
    %519 = vmatpush.bf16.msra.mxu0 0
    %520 = vmatpush.bf16.msra.mxu0 0
    %521 = vmatpush.bf16.msra.mxu0 0
    %522 = vmatpush.bf16.msra.mxu0 0
    %523 = vmatpush.bf16.msra.mxu0 0
    %524 = vmatpush.bf16.msra.mxu0 0
    %525 = vmatpush.bf16.msra.mxu0 %v222
    %526 = vmatpush.bf16.msra.mxu0 %v221
    %527 = vmatmul.bf16.gmra.mxu0 %v517
    %v528 = vpop.f32.mrf.mxu0
    %v529 = vadd.f32 %v474, %v528
    %v530 = vpop.f32.mrf.mxu0
    %531 = vdwg.mxu0
    %v532 = vadd.f32 %v529, %v125
    %v533 = vmul.f32 %v532, %v132
    %v534 = vtanh.pop %v533
    %v535 = vmul.f32 %v534, %v132
    %v536 = vadd.f32 %v535, %v133
    %v537 = vmul.f32 %v536, %v450
    %539 = vrot.lane.b32.xlu0 %v536, 64
    %v540 = vpop.permute.xlu0 %539
    %v542 = vmul.f32 %v536, %v540
    %544 = vrot.lane.b32.xlu0 %v542, 32
    %v545 = vpop.permute.xlu0 %544
    %v547 = vadd.f32 %v537, %v545
    %v548 = vtanh.pop %v547
    %550 = vrot.lane.b32.xlu0 %v548, 64
    %v551 = vpop.permute.xlu0 %550
    %v553 = vmul.f32 %v536, %v551
    %v554 = vpack.c.bf16 %v553, %v553
    %556 = vrot.lane.b32.xlu0 %v554, 32
    %v557 = vpop.permute.xlu0 %556
    %v559 = vsel %vm69, %v557, 0
    %561 = vmatpush.bf16.msra.mxu0 0
    %562 = vmatpush.bf16.msra.mxu0 0
    %563 = vmatpush.bf16.msra.mxu0 0
    %564 = vmatpush.bf16.msra.mxu0 0
    %565 = vmatpush.bf16.msra.mxu0 0
    %566 = vmatpush.bf16.msra.mxu0 0
    %567 = vmatpush.bf16.msra.mxu0 %v143
    %568 = vmatpush.bf16.msra.mxu0 %v142
    %569 = vmatmul.bf16.gmra.mxu0 %v559
    %v570 = vpop.f32.mrf.mxu0
    %v571 = vadd.f32 0.0, %v570
    %v572 = vpop.f32.mrf.mxu0
    %573 = vdwg.mxu0
    %574 = vmatpush.bf16.msra.mxu0 0
    %575 = vmatpush.bf16.msra.mxu0 0
    %576 = vmatpush.bf16.msra.mxu0 0
    %577 = vmatpush.bf16.msra.mxu0 0
    %578 = vmatpush.bf16.msra.mxu0 0
    %579 = vmatpush.bf16.msra.mxu0 0
    %580 = vmatpush.bf16.msra.mxu0 %v171
    %581 = vmatpush.bf16.msra.mxu0 %v170
    %582 = vmatmul.bf16.gmra.mxu0 %v517
    %v583 = vpop.f32.mrf.mxu0
    %v584 = vadd.f32 0.0, %v583
    %v585 = vpop.f32.mrf.mxu0
    %586 = vdwg.mxu0
    %v587 = vadd.f32 %v102, %v584
    %v588 = vmul.f32 %v587, %v132
    %v589 = vtanh.pop %v588
    %v590 = vmul.f32 %v589, %v132
    %v591 = vadd.f32 %v590, %v133
    %v592 = vmul.f32 %v591, %v505
    %594 = vrot.lane.b32.xlu0 %v591, 64
    %v595 = vpop.permute.xlu0 %594
    %v597 = vmul.f32 %v591, %v595
    %599 = vrot.lane.b32.xlu0 %v597, 32
    %v600 = vpop.permute.xlu0 %599
    %v602 = vadd.f32 %v592, %v600
    %v603 = vtanh.pop %v602
    %605 = vrot.lane.b32.xlu0 %v603, 64
    %v606 = vpop.permute.xlu0 %605
    %v608 = vmul.f32 %v591, %v606
    %v609 = vpack.c.bf16 %v608, %v608
    %611 = vrot.lane.b32.xlu0 %v609, 32
    %v612 = vpop.permute.xlu0 %611
    %v614 = vsel %vm69, %v612, 0
    %616 = vmatpush.bf16.msra.mxu0 0
    %617 = vmatpush.bf16.msra.mxu0 0
    %618 = vmatpush.bf16.msra.mxu0 0
    %619 = vmatpush.bf16.msra.mxu0 0
    %620 = vmatpush.bf16.msra.mxu0 0
    %621 = vmatpush.bf16.msra.mxu0 0
    %622 = vmatpush.bf16.msra.mxu0 %v222
    %623 = vmatpush.bf16.msra.mxu0 %v221
    %624 = vmatmul.bf16.gmra.mxu0 %v614
    %v625 = vpop.f32.mrf.mxu0
    %v626 = vadd.f32 %v571, %v625
    %v627 = vpop.f32.mrf.mxu0
    %628 = vdwg.mxu0
    %v629 = vadd.f32 %v626, %v125
    %v630 = vmul.f32 %v629, %v132
    %v631 = vtanh.pop %v630
    %v632 = vmul.f32 %v631, %v132
    %v633 = vadd.f32 %v632, %v133
    %v634 = vmul.f32 %v633, %v547
    %636 = vrot.lane.b32.xlu0 %v633, 64
    %v637 = vpop.permute.xlu0 %636
    %v639 = vmul.f32 %v633, %v637
    %641 = vrot.lane.b32.xlu0 %v639, 32
    %v642 = vpop.permute.xlu0 %641
    %v644 = vadd.f32 %v634, %v642
    %v645 = vtanh.pop %v644
    %647 = vrot.lane.b32.xlu0 %v645, 64
    %v648 = vpop.permute.xlu0 %647
    %v650 = vmul.f32 %v633, %v648
    %v651 = vpack.c.bf16 %v650, %v650
    %653 = vrot.lane.b32.xlu0 %v651, 32
    %v654 = vpop.permute.xlu0 %653
    %v656 = vsel %vm69, %v654, 0
    %658 = vmatpush.bf16.msra.mxu0 0
    %659 = vmatpush.bf16.msra.mxu0 0
    %660 = vmatpush.bf16.msra.mxu0 0
    %661 = vmatpush.bf16.msra.mxu0 0
    %662 = vmatpush.bf16.msra.mxu0 0
    %663 = vmatpush.bf16.msra.mxu0 0
    %664 = vmatpush.bf16.msra.mxu0 %v143
    %665 = vmatpush.bf16.msra.mxu0 %v142
    %666 = vmatmul.bf16.gmra.mxu0 %v656
    %v667 = vpop.f32.mrf.mxu0
    %v668 = vadd.f32 0.0, %v667
    %v669 = vpop.f32.mrf.mxu0
    %670 = vdwg.mxu0
    %671 = vmatpush.bf16.msra.mxu0 0
    %672 = vmatpush.bf16.msra.mxu0 0
    %673 = vmatpush.bf16.msra.mxu0 0
    %674 = vmatpush.bf16.msra.mxu0 0
    %675 = vmatpush.bf16.msra.mxu0 0
    %676 = vmatpush.bf16.msra.mxu0 0
    %677 = vmatpush.bf16.msra.mxu0 %v171
    %678 = vmatpush.bf16.msra.mxu0 %v170
    %679 = vmatmul.bf16.gmra.mxu0 %v614
    %v680 = vpop.f32.mrf.mxu0
    %v681 = vadd.f32 0.0, %v680
    %v682 = vpop.f32.mrf.mxu0
    %683 = vdwg.mxu0
    %v684 = vadd.f32 %v104, %v681
    %v685 = vmul.f32 %v684, %v132
    %v686 = vtanh.pop %v685
    %v687 = vmul.f32 %v686, %v132
    %v688 = vadd.f32 %v687, %v133
    %v689 = vmul.f32 %v688, %v602
    %691 = vrot.lane.b32.xlu0 %v688, 64
    %v692 = vpop.permute.xlu0 %691
    %v694 = vmul.f32 %v688, %v692
    %696 = vrot.lane.b32.xlu0 %v694, 32
    %v697 = vpop.permute.xlu0 %696
    %v699 = vadd.f32 %v689, %v697
    %v700 = vtanh.pop %v699
    %702 = vrot.lane.b32.xlu0 %v700, 64
    %v703 = vpop.permute.xlu0 %702
    %v705 = vmul.f32 %v688, %v703
    %v706 = vpack.c.bf16 %v705, %v705
    %708 = vrot.lane.b32.xlu0 %v706, 32
    %v709 = vpop.permute.xlu0 %708
    %v711 = vsel %vm69, %v709, 0
    %713 = vmatpush.bf16.msra.mxu0 0
    %714 = vmatpush.bf16.msra.mxu0 0
    %715 = vmatpush.bf16.msra.mxu0 0
    %716 = vmatpush.bf16.msra.mxu0 0
    %717 = vmatpush.bf16.msra.mxu0 0
    %718 = vmatpush.bf16.msra.mxu0 0
    %719 = vmatpush.bf16.msra.mxu0 %v222
    %720 = vmatpush.bf16.msra.mxu0 %v221
    %721 = vmatmul.bf16.gmra.mxu0 %v711
    %v722 = vpop.f32.mrf.mxu0
    %v723 = vadd.f32 %v668, %v722
    %v724 = vpop.f32.mrf.mxu0
    %725 = vdwg.mxu0
    %v726 = vadd.f32 %v723, %v125
    %v727 = vmul.f32 %v726, %v132
    %v728 = vtanh.pop %v727
    %v729 = vmul.f32 %v728, %v132
    %v730 = vadd.f32 %v729, %v133
    %v731 = vmul.f32 %v730, %v644
    %733 = vrot.lane.b32.xlu0 %v730, 64
    %v734 = vpop.permute.xlu0 %733
    %v736 = vmul.f32 %v730, %v734
    %738 = vrot.lane.b32.xlu0 %v736, 32
    %v739 = vpop.permute.xlu0 %738
    %v741 = vadd.f32 %v731, %v739
    %v742 = vtanh.pop %v741
    %744 = vrot.lane.b32.xlu0 %v742, 64
    %v745 = vpop.permute.xlu0 %744
    %v747 = vmul.f32 %v730, %v745
    %v748 = vpack.c.bf16 %v747, %v747
    %750 = vrot.lane.b32.xlu0 %v748, 32
    %v751 = vpop.permute.xlu0 %750
    %v753 = vsel %vm69, %v751, 0
    %755 = vmatpush.bf16.msra.mxu0 0
    %756 = vmatpush.bf16.msra.mxu0 0
    %757 = vmatpush.bf16.msra.mxu0 0
    %758 = vmatpush.bf16.msra.mxu0 0
    %759 = vmatpush.bf16.msra.mxu0 0
    %760 = vmatpush.bf16.msra.mxu0 0
    %761 = vmatpush.bf16.msra.mxu0 %v143
    %762 = vmatpush.bf16.msra.mxu0 %v142
    %763 = vmatmul.bf16.gmra.mxu0 %v753
    %v764 = vpop.f32.mrf.mxu0
    %v765 = vadd.f32 0.0, %v764
    %v766 = vpop.f32.mrf.mxu0
    %767 = vdwg.mxu0
    %768 = vmatpush.bf16.msra.mxu0 0
    %769 = vmatpush.bf16.msra.mxu0 0
    %770 = vmatpush.bf16.msra.mxu0 0
    %771 = vmatpush.bf16.msra.mxu0 0
    %772 = vmatpush.bf16.msra.mxu0 0
    %773 = vmatpush.bf16.msra.mxu0 0
    %774 = vmatpush.bf16.msra.mxu0 %v171
    %775 = vmatpush.bf16.msra.mxu0 %v170
    %776 = vmatmul.bf16.gmra.mxu0 %v711
    %v777 = vpop.f32.mrf.mxu0
    %v778 = vadd.f32 0.0, %v777
    %v779 = vpop.f32.mrf.mxu0
    %780 = vdwg.mxu0
    %v781 = vadd.f32 %v107, %v778
    %v782 = vmul.f32 %v781, %v132
    %v783 = vtanh.pop %v782
    %v784 = vmul.f32 %v783, %v132
    %v785 = vadd.f32 %v784, %v133
    %v786 = vmul.f32 %v785, %v699
    %788 = vrot.lane.b32.xlu0 %v785, 64
    %v789 = vpop.permute.xlu0 %788
    %v791 = vmul.f32 %v785, %v789
    %793 = vrot.lane.b32.xlu0 %v791, 32
    %v794 = vpop.permute.xlu0 %793
    %v796 = vadd.f32 %v786, %v794
    %v797 = vtanh.pop %v796
    %799 = vrot.lane.b32.xlu0 %v797, 64
    %v800 = vpop.permute.xlu0 %799
    %v802 = vmul.f32 %v785, %v800
    %v803 = vpack.c.bf16 %v802, %v802
    %805 = vrot.lane.b32.xlu0 %v803, 32
    %v806 = vpop.permute.xlu0 %805
    %v808 = vsel %vm69, %v806, 0
    %810 = vmatpush.bf16.msra.mxu0 0
    %811 = vmatpush.bf16.msra.mxu0 0
    %812 = vmatpush.bf16.msra.mxu0 0
    %813 = vmatpush.bf16.msra.mxu0 0
    %814 = vmatpush.bf16.msra.mxu0 0
    %815 = vmatpush.bf16.msra.mxu0 0
    %816 = vmatpush.bf16.msra.mxu0 %v222
    %817 = vmatpush.bf16.msra.mxu0 %v221
    %818 = vmatmul.bf16.gmra.mxu0 %v808
    %v819 = vpop.f32.mrf.mxu0
    %v820 = vadd.f32 %v765, %v819
    %v821 = vpop.f32.mrf.mxu0
    %822 = vdwg.mxu0
    %v823 = vadd.f32 %v820, %v125
    %v824 = vmul.f32 %v823, %v132
    %v825 = vtanh.pop %v824
    %v826 = vmul.f32 %v825, %v132
    %v827 = vadd.f32 %v826, %v133
    %v828 = vmul.f32 %v827, %v741
    %830 = vrot.lane.b32.xlu0 %v827, 64
    %v831 = vpop.permute.xlu0 %830
    %v833 = vmul.f32 %v827, %v831
    %835 = vrot.lane.b32.xlu0 %v833, 32
    %v836 = vpop.permute.xlu0 %835
    %v838 = vadd.f32 %v828, %v836
    %v839 = vtanh.pop %v838
    %841 = vrot.lane.b32.xlu0 %v839, 64
    %v842 = vpop.permute.xlu0 %841
    %v844 = vmul.f32 %v827, %v842
    %v845 = vpack.c.bf16 %v844, %v844
    %847 = vrot.lane.b32.xlu0 %v845, 32
    %v848 = vpop.permute.xlu0 %847
    %v850 = vsel %vm69, %v848, 0
    %852 = vmatpush.bf16.msra.mxu0 0
    %853 = vmatpush.bf16.msra.mxu0 0
    %854 = vmatpush.bf16.msra.mxu0 0
    %855 = vmatpush.bf16.msra.mxu0 0
    %856 = vmatpush.bf16.msra.mxu0 0
    %857 = vmatpush.bf16.msra.mxu0 0
    %858 = vmatpush.bf16.msra.mxu0 %v143
    %859 = vmatpush.bf16.msra.mxu0 %v142
    %860 = vmatmul.bf16.gmra.mxu0 %v850
    %v861 = vpop.f32.mrf.mxu0
    %v862 = vadd.f32 0.0, %v861
    %v863 = vpop.f32.mrf.mxu0
    %864 = vdwg.mxu0
    %865 = vmatpush.bf16.msra.mxu0 0
    %866 = vmatpush.bf16.msra.mxu0 0
    %867 = vmatpush.bf16.msra.mxu0 0
    %868 = vmatpush.bf16.msra.mxu0 0
    %869 = vmatpush.bf16.msra.mxu0 0
    %870 = vmatpush.bf16.msra.mxu0 0
    %871 = vmatpush.bf16.msra.mxu0 %v171
    %872 = vmatpush.bf16.msra.mxu0 %v170
    %873 = vmatmul.bf16.gmra.mxu0 %v808
    %v874 = vpop.f32.mrf.mxu0
    %v875 = vadd.f32 0.0, %v874
    %v876 = vpop.f32.mrf.mxu0
    %877 = vdwg.mxu0
    %v878 = vadd.f32 %v109, %v875
    %v879 = vmul.f32 %v878, %v132
    %v880 = vtanh.pop %v879
    %v881 = vmul.f32 %v880, %v132
    %v882 = vadd.f32 %v881, %v133
    %v883 = vmul.f32 %v882, %v796
    %885 = vrot.lane.b32.xlu0 %v882, 64
    %v886 = vpop.permute.xlu0 %885
    %v888 = vmul.f32 %v882, %v886
    %890 = vrot.lane.b32.xlu0 %v888, 32
    %v891 = vpop.permute.xlu0 %890
    %v893 = vadd.f32 %v883, %v891
    %v894 = vtanh.pop %v893
    %896 = vrot.lane.b32.xlu0 %v894, 64
    %v897 = vpop.permute.xlu0 %896
    %v899 = vmul.f32 %v882, %v897
    %v900 = vpack.c.bf16 %v899, %v899
    %902 = vrot.lane.b32.xlu0 %v900, 32
    %v903 = vpop.permute.xlu0 %902
    %v905 = vsel %vm69, %v903, 0
    %907 = vmatpush.bf16.msra.mxu0 0
    %908 = vmatpush.bf16.msra.mxu0 0
    %909 = vmatpush.bf16.msra.mxu0 0
    %910 = vmatpush.bf16.msra.mxu0 0
    %911 = vmatpush.bf16.msra.mxu0 0
    %912 = vmatpush.bf16.msra.mxu0 0
    %913 = vmatpush.bf16.msra.mxu0 %v222
    %914 = vmatpush.bf16.msra.mxu0 %v221
    %915 = vmatmul.bf16.gmra.mxu0 %v905
    %v916 = vpop.f32.mrf.mxu0
    %v917 = vadd.f32 %v862, %v916
    %v918 = vpop.f32.mrf.mxu0
    %919 = vdwg.mxu0
    %v920 = vadd.f32 %v917, %v125
    %v921 = vmul.f32 %v920, %v132
    %v922 = vtanh.pop %v921
    %v923 = vmul.f32 %v922, %v132
    %v924 = vadd.f32 %v923, %v133
    %v925 = vmul.f32 %v924, %v838
    %927 = vrot.lane.b32.xlu0 %v924, 64
    %v928 = vpop.permute.xlu0 %927
    %v930 = vmul.f32 %v924, %v928
    %932 = vrot.lane.b32.xlu0 %v930, 32
    %v933 = vpop.permute.xlu0 %932
    %v935 = vadd.f32 %v925, %v933
    %v936 = vtanh.pop %v935
    %938 = vrot.lane.b32.xlu0 %v936, 64
    %v939 = vpop.permute.xlu0 %938
    %v941 = vmul.f32 %v924, %v939
    %v942 = vld [vmem:[%s7] sm:$0xf]
    %v943 = vld [vmem:[%s7 + $0x4] sm:$0xf]
    %v944 = vld [vmem:[%s7 + $0x8] sm:$0xf]
    %v945 = vld [vmem:[%s7 + $0xc] sm:$0xf]
    %v946 = vpack.c.bf16 %v941, %v941
    %v947 = vld [vmem:[%s8] sm:$0xf]
    %v948 = vld [vmem:[%s8 + $0x4] sm:$0xf]
    %v949 = vld [vmem:[%s8 + $0x8] sm:$0xf]
    %v950 = vld [vmem:[%s8 + $0xc] sm:$0xf]
    %952 = vrot.lane.b32.xlu0 %v946, 32
    %v953 = vpop.permute.xlu0 %952
    %v958 = vunpack.c.l.b16 %v947
    %v959 = vunpack.c.l.b16 %v948
    %v960 = vunpack.c.l.b16 %v949
    %v961 = vunpack.c.l.b16 %v950
    %v962 = vpack.c.b16 %v959, %v958
    %v963 = vpack.c.b16 %v961, %v960
    %v967 = vsel %vm69, %v953, 0
    %969 = vmatpush.bf16.msra.mxu0 0
    %970 = vmatpush.bf16.msra.mxu0 0
    %971 = vmatpush.bf16.msra.mxu0 0
    %972 = vmatpush.bf16.msra.mxu0 0
    %973 = vmatpush.bf16.msra.mxu0 0
    %974 = vmatpush.bf16.msra.mxu0 0
    %975 = vmatpush.bf16.msra.mxu0 %v963
    %976 = vmatpush.bf16.msra.mxu0 %v962
    %977 = vmatmul.bf16.gmra.mxu0 %v967
    %v978 = vpop.f32.mrf.mxu0
    %v979 = vadd.f32 0.0, %v978
    %v980 = vpop.f32.mrf.mxu0
    %981 = vdwg.mxu0
    %v986 = vunpack.c.l.b16 %v942
    %v987 = vunpack.c.l.b16 %v943
    %v988 = vunpack.c.l.b16 %v944
    %v989 = vunpack.c.l.b16 %v945
    %v990 = vpack.c.b16 %v987, %v986
    %v991 = vpack.c.b16 %v989, %v988
    %994 = vmatpush.bf16.msra.mxu0 0
    %995 = vmatpush.bf16.msra.mxu0 0
    %996 = vmatpush.bf16.msra.mxu0 0
    %997 = vmatpush.bf16.msra.mxu0 0
    %998 = vmatpush.bf16.msra.mxu0 0
    %999 = vmatpush.bf16.msra.mxu0 0
    %1000 = vmatpush.bf16.msra.mxu0 %v991
    %1001 = vmatpush.bf16.msra.mxu0 %v990
    %1002 = vmatmul.bf16.gmra.mxu0 %v905
    %v1003 = vpop.f32.mrf.mxu0
    %v1004 = vadd.f32 %v979, %v1003
    %v1005 = vpop.f32.mrf.mxu0
    %1006 = vdwg.mxu0
    %v1007 = vld [vmem:[%s9] sm:$0x1]
    %v1009 = vperm.slane %v1007, 0
    %v1011 = vadd.f32 %v1004, %v1009
    %1012 = vst [vmem:[#allocation2] sm:$0xff] %v1011
    // Predicated region
    $region42: #{tpu_custom_call.1} parent=1 // pred_check
      _
    $region43: #{tpu_custom_call.1} parent=1 // pred_check_branch
      %1014 = sbr.rel (0) target = $region45
    $region44: #{tpu_custom_call.1} parent=1 // pred_region
      %1016 = vsyncadd [#allocation3], 0
      %s1018 = sshll.u32 [#allocation2], 4
      %s1019 = int_to_ptr.vmem [resolvable:$true] %s1018
      %s1020 = sshll.u32 %s10, 4
      %s1021 = int_to_ptr.hbm [resolvable:$true] %s1020
      %1023 = dma.vmem_to_hbm [thread:$0]  %s1019, 128, %s1021, [#allocation3]
    $region45: #{tpu_custom_call.1} parent=1 // pred_fallthru
      _
    // Predicated region
    $region46: #{tpu_custom_call.1} parent=1 // pred_check
      _
    $region47: #{tpu_custom_call.1} parent=1 // pred_check_branch
      %1025 = sbr.rel (0) target = $region49
    $region48: #{tpu_custom_call.1} parent=1 // pred_region
      %1027 = dma.done [#allocation3], 128
    $region49: #{tpu_custom_call.1} parent=1 // pred_fallthru
      _
    %1028 = vsyncpa [#allocation3], 1

</llo_original>
